<compile_context>
chip_gen: v5e
topology: v5e:2x2
jax: 0.10.0
libtpu: 0.0.40
codegen_flags: <defaults>
</compile_context>

<pallas_src>
import functools

import jax
import jax.numpy as jnp
from jax.experimental import pallas as pl
from jax.experimental.pallas import tpu as pltpu


# ----------------------------- element-wise math (f32) -----------------------------

def _gelu_exact_f32(x):
    """Exact (erf-based) GELU matching F.gelu default; erf via Abramowitz-Stegun 7.1.26
    (max abs error ~1.5e-7). Uses only exp/mul/div/where -> guaranteed Mosaic lowerings.
    Exact divides kept so the f32 path stays within 1e-4 of the reference
    (pl.reciprocal(approx=True) could move them to the EUP if accuracy allows)."""
    z = x * 0.7071067811865476
    az = jnp.abs(z)
    t = 1.0 / (1.0 + 0.3275911 * az)
    poly = t * (0.254829592 + t * (-0.284496736 + t * (1.421413741
                + t * (-1.453152027 + t * 1.061405429))))
    erf_abs = 1.0 - poly * jnp.exp(-az * az)
    erf = jnp.where(z >= 0.0, erf_abs, -erf_abs)
    return 0.5 * x * (1.0 + erf)


def _gelu_tanh_f32(x):
    """PyTorch F.gelu(approximate='tanh'): one EUP tanh per element. Swap in on v7x if,
    after the memory fixes, the EUP exp in the erf path becomes the binding slot."""
    inner = 0.7978845608028654 * (x + 0.044715 * x * x * x)
    return 0.5 * x * (1.0 + jnp.tanh(inner))


def _sigmoid_f32(x):
    return 1.0 / (1.0 + jnp.exp(-x))


# ----------------------------------- kernel ----------------------------------------

def _tcs_kernel(x_ref, wp_ref, bp_ref, wg_ref, bg_ref, out_ref, *,
                num_gates, dim, use_sigmoid, block_diag, tanh_gelu):
    gelu = _gelu_tanh_f32 if tanh_gelu else _gelu_exact_f32

    # Stage 1: fused projection (rows, D) @ (D, G*D); f32 accumulate, f32 element-wise.
    h = jnp.dot(x_ref[...], wp_ref[...], preferred_element_type=jnp.float32)
    h = gelu(h + bp_ref[...])
    hm = h.astype(wg_ref.dtype)            # single cast to MXU operand dtype

    if block_diag:
        # Stage 2 fused: one matmul against the block-diagonal gate weight, one
        # lane-dense (rows, G*D) store. No sub-vreg slicing, no masked stores.
        o = jnp.dot(hm, wg_ref[...], preferred_element_type=jnp.float32) + bg_ref[...]
        if use_sigmoid:
            o = _sigmoid_f32(o)
        out_ref[...] = o.astype(out_ref.dtype)
    else:
        # D >= 128: per-gate matmuls (avoid the G x FLOP blow-up of the block-diagonal
        # trick). Slices land on 128-lane multiples; output remains one lane-dense slab.
        wg = wg_ref[...]
        bg = bg_ref[...]
        for g in range(num_gates):
            lo, hi = g * dim, (g + 1) * dim
            o = jnp.dot(hm[:, lo:hi], wg[:, lo:hi],
                        preferred_element_type=jnp.float32) + bg[:, lo:hi]
            if use_sigmoid:
                o = _sigmoid_f32(o)
            out_ref[:, lo:hi] = o.astype(out_ref.dtype)


# --------------------------- tiling / VMEM budgeting --------------------------------

def _derive_tiling(R, D, G, in_bytes, out_bytes, w_bytes, block_rows, block_diag):
    """Derive the row-tile size and vmem_limit_bytes from the device's physical VMEM
    (64 MiB per TensorCore on v7x, 128 MiB on v5e/v6e)."""
    try:
        vmem_phys = int(pltpu.get_tpu_info().vmem_capacity_bytes)
    except Exception:
        vmem_phys = 64 * 1024 * 1024               # conservative default = v7x per-TC
    budget = int(vmem_phys * 0.6)                  # headroom for compiler scratch/spills

    GD = G * D
    wg_rows = GD if block_diag else D
    # Weights + biases (worst case: double-buffered if pl.Buffered(1) is unavailable).
    fixed = 2 * (w_bytes * (D * GD + wg_rows * GD) + 4 * 2 * GD)
    # Per-row bytes: double-buffered x block + double-buffered out block
    #                + f32 h intermediate + matmul-dtype copy of h.
    per_row = 2 * D * in_bytes + 2 * GD * out_bytes + GD * 4 + GD * w_bytes
    cap = max(8, (budget - fixed) // per_row)

    br = int(min(block_rows, R, cap))
    if br < R:
        br = max(8, (br // 8) * 8)                 # (8,128) sublane alignment
    # v7x has 2 TensorCores: give the ("parallel",) row axis at least 2 grid steps.
    if pl.cdiv(R, br) < 2 and R >= 16:
        br = max(8, ((pl.cdiv(R, 2) + 7) // 8) * 8)

    est = fixed + per_row * br
    vmem_limit = int(min(int(vmem_phys * 0.75), max(32 * 1024 * 1024, 2 * est)))
    return br, vmem_limit


# ----------------------------------- wrapper ----------------------------------------

def tcs_layer(x, params, *, use_sigmoid_gate: bool = False, block_rows: int = 4096,
              matmul_dtype=None, out_dtype=None, tanh_gelu: bool = False):
    """x: (..., dim). Returns (gate_det, gate_seg, gate_occ_or_None), each (..., dim)."""
    orig_shape = x.shape
    D = orig_shape[-1]
    mdt = jnp.dtype(matmul_dtype) if matmul_dtype is not None else jnp.dtype(x.dtype)
    odt = jnp.dtype(out_dtype) if out_dtype is not None else jnp.dtype(x.dtype)

    gate_ws = params["gate_w_t"]              # list of (D, D), pre-transposed (in, out)
    gate_bs = params["gate_b"]                # list of (1, D)
    G = len(gate_ws)
    GD = G * D
    block_diag = D < 128                      # fuse gates via block-diag only when lane-sparse

    # ----- operand packing (wrapper side: casts + lane-dense weight layouts) -----
    x2 = x.reshape(-1, D).astype(mdt)         # bf16 here halves input HBM traffic
    R = x2.shape[0]
    wp = params["proj_w_t"].astype(mdt)                      # (D, G*D)
    bp = params["proj_b"].astype(jnp.float32)                # (1, G*D), bias stays f32
    bg = jnp.concatenate(gate_bs, axis=-1).astype(jnp.float32)  # (1, G*D)
    if block_diag:
        wg = jnp.zeros((GD, GD), mdt)                        # block-diagonal gate weight
        for g, w in enumerate(gate_ws):
            wg = wg.at[g * D:(g + 1) * D, g * D:(g + 1) * D].set(w.astype(mdt))
    else:
        wg = jnp.concatenate([w.astype(mdt) for w in gate_ws], axis=-1)  # (D, G*D)

    br, vmem_limit = _derive_tiling(R, D, G, mdt.itemsize, odt.itemsize, mdt.itemsize,
                                    block_rows, block_diag)
    grid = (pl.cdiv(R, br),)

    kernel = functools.partial(_tcs_kernel, num_gates=G, dim=D,
                               use_sigmoid=use_sigmoid_gate,
                               block_diag=block_diag, tanh_gelu=tanh_gelu)

    row_in_spec = pl.BlockSpec((br, D), lambda i: (i, 0))
    out_spec = pl.BlockSpec((br, GD), lambda i: (i, 0))

    def call(single_buffer_weights: bool):
        def const_spec(shape):
            if single_buffer_weights:
                # Weights/biases never change across the grid -> single buffer.
                return pl.BlockSpec(shape, lambda i: (0, 0), pipeline_mode=pl.Buffered(1))
            return pl.BlockSpec(shape, lambda i: (0, 0))

        return pl.pallas_call(
            kernel,
            out_shape=jax.ShapeDtypeStruct((R, GD), odt),
            grid_spec=pltpu.PrefetchScalarGridSpec(
                num_scalar_prefetch=0,
                grid=grid,
                in_specs=[row_in_spec,
                          const_spec(wp.shape),
                          const_spec(bp.shape),
                          const_spec(wg.shape),
                          const_spec(bg.shape)],
                out_specs=out_spec),
            compiler_params=pltpu.CompilerParams(
                dimension_semantics=("parallel",),
                vmem_limit_bytes=vmem_limit),
        )(x2, wp, bp, wg, bg)

    try:
        out_all = call(True)
    except Exception:
        # pl.Buffered(1) single buffering not supported on this jax/Mosaic build;
        # fall back to default double-buffered constant blocks.
        out_all = call(False)

    out_all = out_all.reshape(*orig_shape[:-1], GD)
    outs = [out_all[..., g * D:(g + 1) * D] for g in range(G)]
    if G == 2:
        return outs[0], outs[1], None
    return outs[0], outs[1], outs[2]


# ------------------------------ params & reference ----------------------------------

def init_params(key, dim, *, num_gates=2):
    """Synthetic deterministic init mimicking nn.Linear defaults (uniform +-1/sqrt(fan_in)).
    Weights stored pre-transposed so the kernel right-multiplies (y = x @ W^T + b)."""
    bound = 1.0 / (dim ** 0.5)
    keys = jax.random.split(key, 2 + 2 * num_gates)
    proj_w = jax.random.uniform(keys[0], (num_gates * dim, dim),
                                minval=-bound, maxval=bound, dtype=jnp.float32)
    proj_b = jax.random.uniform(keys[1], (1, num_gates * dim),
                                minval=-bound, maxval=bound, dtype=jnp.float32)
    gate_w_t, gate_b = [], []
    for g in range(num_gates):
        w = jax.random.uniform(keys[2 + 2 * g], (dim, dim),
                               minval=-bound, maxval=bound, dtype=jnp.float32)
        b = jax.random.uniform(keys[3 + 2 * g], (1, dim),
                               minval=-bound, maxval=bound, dtype=jnp.float32)
        gate_w_t.append(w.T)
        gate_b.append(b)
    return {"proj_w_t": proj_w.T, "proj_b": proj_b,
            "gate_w_t": gate_w_t, "gate_b": gate_b}


def _reference(x, params, use_sigmoid_gate=False):
    """Pure-JAX reference (exact erf GELU, as in F.gelu default)."""
    D = x.shape[-1]
    G = len(params["gate_w_t"])
    h = jax.nn.gelu(x @ params["proj_w_t"] + params["proj_b"], approximate=False)
    outs = []
    for g in range(G):
        o = h[..., g * D:(g + 1) * D] @ params["gate_w_t"][g] + params["gate_b"][g]
        if use_sigmoid_gate:
            o = jax.nn.sigmoid(o)
        outs.append(o)
    if G == 2:
        outs.append(None)
    return tuple(outs)


# ------------------------------------- demo -----------------------------------------

if __name__ == "__main__":
    dim = 32
    batch, seq = 2, 64                            # 128 rows total

    key = jax.random.PRNGKey(0)
    kx, kp2, kp3 = jax.random.split(key, 3)
    x = jax.random.normal(kx, (batch, seq, dim), dtype=jnp.float32)

    # --- Default config: SPLIT_GATE=False, TRAIN_OCC=False, USE_SIGMOID_GATE=False.
    params2 = init_params(kp2, dim, num_gates=2)
    det, seg, occ = tcs_layer(x, params2)
    det, seg = jax.block_until_ready((det, seg))
    rdet, rseg, _ = _reference(x, params2)
    assert occ is None
    assert det.shape == x.shape and seg.shape == x.shape
    assert jnp.allclose(det, rdet, atol=1e-4, rtol=1e-4), "det mismatch vs reference"
    assert jnp.allclose(seg, rseg, atol=1e-4, rtol=1e-4), "seg mismatch vs reference"

    # --- bf16 MXU operands AND bf16 outputs (halved HBM traffic); f32 accumulation,
    #     f32 element-wise math inside the kernel.
    det_bf, seg_bf, _ = tcs_layer(x, params2, matmul_dtype=jnp.bfloat16,
                                  out_dtype=jnp.bfloat16)
    det_bf, seg_bf = jax.block_until_ready((det_bf, seg_bf))
    assert det_bf.dtype == jnp.bfloat16 and seg_bf.dtype == jnp.bfloat16
    assert jnp.allclose(det_bf.astype(jnp.float32), rdet, atol=1e-1, rtol=1e-1), \
        "bf16 det drift too large"
    assert jnp.allclose(seg_bf.astype(jnp.float32), rseg, atol=1e-1, rtol=1e-1), \
        "bf16 seg drift too large"

    # --- TRAIN_OCC=True + USE_SIGMOID_GATE=True branch (3 gates).
    params3 = init_params(kp3, dim, num_gates=3)
    d3, s3, o3 = tcs_layer(x, params3, use_sigmoid_gate=True)
    d3, s3, o3 = jax.block_until_ready((d3, s3, o3))
    rd3, rs3, ro3 = _reference(x, params3, use_sigmoid_gate=True)
    assert o3 is not None
    assert jnp.allclose(d3, rd3, atol=1e-4, rtol=1e-4), "occ-config det mismatch"
    assert jnp.allclose(s3, rs3, atol=1e-4, rtol=1e-4), "occ-config seg mismatch"
    assert jnp.allclose(o3, ro3, atol=1e-4, rtol=1e-4), "occ-config occ mismatch"

    print("KERNEL_OK")
</pallas_src>

<mosaic_0001>
module attributes {stable_mosaic.version = 11 : i64} {
  func.func @_tcs_kernel(%arg0: i32, %arg1: memref<64x32xf32, #tpu.memory_space<vmem>>, %arg2: memref<32x64xf32, #tpu.memory_space<vmem>>, %arg3: memref<1x64xf32, #tpu.memory_space<vmem>>, %arg4: memref<64x64xf32, #tpu.memory_space<vmem>>, %arg5: memref<1x64xf32, #tpu.memory_space<vmem>>, %arg6: memref<64x64xf32, #tpu.memory_space<vmem>>) attributes {dimension_semantics = [#tpu.dimension_semantics<parallel>], iteration_bounds = array<i64: 2>, scalar_prefetch = 0 : i64, scratch_operands = 0 : i64, tpu.core_type = #tpu.core_type<tc>, window_params = [{transform_indices = @transform_0, window_bounds = array<i64: 64, 32>}, {pipeline_mode = #tpu.pipeline_mode<synchronous>, transform_indices = @transform_1, window_bounds = array<i64: 32, 64>}, {pipeline_mode = #tpu.pipeline_mode<synchronous>, transform_indices = @transform_2, window_bounds = array<i64: 1, 64>}, {pipeline_mode = #tpu.pipeline_mode<synchronous>, transform_indices = @transform_3, window_bounds = array<i64: 64, 64>}, {pipeline_mode = #tpu.pipeline_mode<synchronous>, transform_indices = @transform_4, window_bounds = array<i64: 1, 64>}, {transform_indices = @transform_5, window_bounds = array<i64: 64, 64>}]} {
    %c0 = arith.constant 0 : index
    %c0_0 = arith.constant 0 : index
    %0 = vector.load %arg1[%c0, %c0_0] : memref<64x32xf32, #tpu.memory_space<vmem>>, vector<64x32xf32>
    %c0_1 = arith.constant 0 : index
    %c0_2 = arith.constant 0 : index
    %1 = vector.load %arg2[%c0_1, %c0_2] : memref<32x64xf32, #tpu.memory_space<vmem>>, vector<32x64xf32>
    %cst = arith.constant dense<0.000000e+00> : vector<64x64xf32>
    %2 = tpu.matmul %0, %1, %cst {dimension_numbers = #tpu.dot_dimension_numbers<[1], [0], [0], [1], [0, 0, 1, 1], [], []>} : vector<64x32xf32>, vector<32x64xf32>, vector<64x64xf32> -> vector<64x64xf32>
    %c0_3 = arith.constant 0 : index
    %c0_4 = arith.constant 0 : index
    %3 = vector.load %arg3[%c0_3, %c0_4] : memref<1x64xf32, #tpu.memory_space<vmem>>, vector<1x64xf32>
    %4 = vector.broadcast %3 : vector<1x64xf32> to vector<64x64xf32>
    %5 = arith.addf %2, %4 : vector<64x64xf32>
    %cst_5 = arith.constant 0.707106769 : f32
    %6 = vector.broadcast %cst_5 : f32 to vector<64x64xf32>
    %7 = arith.mulf %5, %6 : vector<64x64xf32>
    %8 = math.absf %7 : vector<64x64xf32>
    %cst_6 = arith.constant 0.327591091 : f32
    %9 = vector.broadcast %cst_6 : f32 to vector<64x64xf32>
    %10 = arith.mulf %9, %8 : vector<64x64xf32>
    %cst_7 = arith.constant 1.000000e+00 : f32
    %11 = vector.broadcast %cst_7 : f32 to vector<64x64xf32>
    %12 = arith.addf %11, %10 : vector<64x64xf32>
    %cst_8 = arith.constant 1.000000e+00 : f32
    %13 = vector.broadcast %cst_8 : f32 to vector<64x64xf32>
    %14 = arith.divf %13, %12 : vector<64x64xf32>
    %cst_9 = arith.constant 1.06140542 : f32
    %15 = vector.broadcast %cst_9 : f32 to vector<64x64xf32>
    %16 = arith.mulf %14, %15 : vector<64x64xf32>
    %cst_10 = arith.constant -1.45315206 : f32
    %17 = vector.broadcast %cst_10 : f32 to vector<64x64xf32>
    %18 = arith.addf %17, %16 : vector<64x64xf32>
    %19 = arith.mulf %14, %18 : vector<64x64xf32>
    %cst_11 = arith.constant 1.42141378 : f32
    %20 = vector.broadcast %cst_11 : f32 to vector<64x64xf32>
    %21 = arith.addf %20, %19 : vector<64x64xf32>
    %22 = arith.mulf %14, %21 : vector<64x64xf32>
    %cst_12 = arith.constant -0.284496725 : f32
    %23 = vector.broadcast %cst_12 : f32 to vector<64x64xf32>
    %24 = arith.addf %23, %22 : vector<64x64xf32>
    %25 = arith.mulf %14, %24 : vector<64x64xf32>
    %cst_13 = arith.constant 0.254829586 : f32
    %26 = vector.broadcast %cst_13 : f32 to vector<64x64xf32>
    %27 = arith.addf %26, %25 : vector<64x64xf32>
    %28 = arith.mulf %14, %27 : vector<64x64xf32>
    %cst_14 = arith.constant 0.000000e+00 : f32
    %29 = vector.broadcast %cst_14 : f32 to vector<64x64xf32>
    %30 = arith.subf %29, %8 : vector<64x64xf32>
    %31 = arith.mulf %30, %8 : vector<64x64xf32>
    %32 = math.exp %31 : vector<64x64xf32>
    %33 = arith.mulf %28, %32 : vector<64x64xf32>
    %cst_15 = arith.constant 1.000000e+00 : f32
    %34 = vector.broadcast %cst_15 : f32 to vector<64x64xf32>
    %35 = arith.subf %34, %33 : vector<64x64xf32>
    %cst_16 = arith.constant 0.000000e+00 : f32
    %36 = vector.broadcast %cst_16 : f32 to vector<64x64xf32>
    %37 = arith.cmpf oge, %7, %36 : vector<64x64xf32>
    %cst_17 = arith.constant 0.000000e+00 : f32
    %38 = vector.broadcast %cst_17 : f32 to vector<64x64xf32>
    %39 = arith.subf %38, %35 : vector<64x64xf32>
    %40 = arith.select %37, %35, %39 : vector<64x64xi1>, vector<64x64xf32>
    %cst_18 = arith.constant 5.000000e-01 : f32
    %41 = vector.broadcast %cst_18 : f32 to vector<64x64xf32>
    %42 = arith.mulf %41, %5 : vector<64x64xf32>
    %cst_19 = arith.constant 1.000000e+00 : f32
    %43 = vector.broadcast %cst_19 : f32 to vector<64x64xf32>
    %44 = arith.addf %43, %40 : vector<64x64xf32>
    %45 = arith.mulf %42, %44 : vector<64x64xf32>
    %c0_20 = arith.constant 0 : index
    %c0_21 = arith.constant 0 : index
    %46 = vector.load %arg4[%c0_20, %c0_21] : memref<64x64xf32, #tpu.memory_space<vmem>>, vector<64x64xf32>
    %cst_22 = arith.constant dense<0.000000e+00> : vector<64x64xf32>
    %47 = tpu.matmul %45, %46, %cst_22 {dimension_numbers = #tpu.dot_dimension_numbers<[1], [0], [0], [1], [0, 0, 1, 1], [], []>} : vector<64x64xf32>, vector<64x64xf32>, vector<64x64xf32> -> vector<64x64xf32>
    %c0_23 = arith.constant 0 : index
    %c0_24 = arith.constant 0 : index
    %48 = vector.load %arg5[%c0_23, %c0_24] : memref<1x64xf32, #tpu.memory_space<vmem>>, vector<1x64xf32>
    %49 = vector.broadcast %48 : vector<1x64xf32> to vector<64x64xf32>
    %50 = arith.addf %47, %49 : vector<64x64xf32>
    %c0_25 = arith.constant 0 : index
    %c0_26 = arith.constant 0 : index
    %51 = vector.load %arg6[%c0_25, %c0_26] : memref<64x64xf32, #tpu.memory_space<vmem>>, vector<64x64xf32>
    tpu.vector_store %arg6[%c0_25, %c0_26], %50 {strides = array<i32>} : memref<64x64xf32, #tpu.memory_space<vmem>>, vector<64x64xf32>,
    return
  }
  func.func @transform_0(%arg0: i32) -> (i32, i32) {
    %c0_i32 = arith.constant 0 : i32
    %c0_i32_0 = arith.constant 0 : i32
    return %arg0, %c0_i32 : i32, i32
  }
  func.func @transform_1(%arg0: i32) -> (i32, i32) {
    %c0_i32 = arith.constant 0 : i32
    %c0_i32_0 = arith.constant 0 : i32
    %c0_i32_1 = arith.constant 0 : i32
    return %c0_i32, %c0_i32_0 : i32, i32
  }
  func.func @transform_2(%arg0: i32) -> (i32, i32) {
    %c0_i32 = arith.constant 0 : i32
    %c0_i32_0 = arith.constant 0 : i32
    %c0_i32_1 = arith.constant 0 : i32
    return %c0_i32, %c0_i32_0 : i32, i32
  }
  func.func @transform_3(%arg0: i32) -> (i32, i32) {
    %c0_i32 = arith.constant 0 : i32
    %c0_i32_0 = arith.constant 0 : i32
    %c0_i32_1 = arith.constant 0 : i32
    return %c0_i32, %c0_i32_0 : i32, i32
  }
  func.func @transform_4(%arg0: i32) -> (i32, i32) {
    %c0_i32 = arith.constant 0 : i32
    %c0_i32_0 = arith.constant 0 : i32
    %c0_i32_1 = arith.constant 0 : i32
    return %c0_i32, %c0_i32_0 : i32, i32
  }
  func.func @transform_5(%arg0: i32) -> (i32, i32) {
    %c0_i32 = arith.constant 0 : i32
    %c0_i32_0 = arith.constant 0 : i32
    return %arg0, %c0_i32 : i32, i32
  }
}

module attributes {stable_mosaic.version = 11 : i64} {
  func.func @_tcs_kernel(%arg0: i32, %arg1: memref<64x32xf32, #tpu.memory_space<vmem>>, %arg2: memref<32x64xf32, #tpu.memory_space<vmem>>, %arg3: memref<1x64xf32, #tpu.memory_space<vmem>>, %arg4: memref<64x64xf32, #tpu.memory_space<vmem>>, %arg5: memref<1x64xf32, #tpu.memory_space<vmem>>, %arg6: memref<64x64xf32, #tpu.memory_space<vmem>>) attributes {dimension_semantics = [#tpu.dimension_semantics<parallel>], iteration_bounds = array<i64: 2>, scalar_prefetch = 0 : i64, scratch_operands = 0 : i64, tpu.core_type = #tpu.core_type<tc>, window_params = [{transform_indices = @transform_0, window_bounds = array<i64: 64, 32>}, {pipeline_mode = #tpu.pipeline_mode<synchronous>, transform_indices = @transform_1, window_bounds = array<i64: 32, 64>}, {pipeline_mode = #tpu.pipeline_mode<synchronous>, transform_indices = @transform_2, window_bounds = array<i64: 1, 64>}, {pipeline_mode = #tpu.pipeline_mode<synchronous>, transform_indices = @transform_3, window_bounds = array<i64: 64, 64>}, {pipeline_mode = #tpu.pipeline_mode<synchronous>, transform_indices = @transform_4, window_bounds = array<i64: 1, 64>}, {transform_indices = @transform_5, window_bounds = array<i64: 64, 64>}]} {
    %c0 = arith.constant 0 : index
    %c0_0 = arith.constant 0 : index
    %0 = vector.load %arg1[%c0, %c0_0] : memref<64x32xf32, #tpu.memory_space<vmem>>, vector<64x32xf32>
    %c0_1 = arith.constant 0 : index
    %c0_2 = arith.constant 0 : index
    %1 = vector.load %arg2[%c0_1, %c0_2] : memref<32x64xf32, #tpu.memory_space<vmem>>, vector<32x64xf32>
    %cst = arith.constant dense<0.000000e+00> : vector<64x64xf32>
    %2 = tpu.matmul %0, %1, %cst {dimension_numbers = #tpu.dot_dimension_numbers<[1], [0], [0], [1], [0, 0, 1, 1], [], []>} : vector<64x32xf32>, vector<32x64xf32>, vector<64x64xf32> -> vector<64x64xf32>
    %c0_3 = arith.constant 0 : index
    %c0_4 = arith.constant 0 : index
    %3 = vector.load %arg3[%c0_3, %c0_4] : memref<1x64xf32, #tpu.memory_space<vmem>>, vector<1x64xf32>
    %4 = vector.broadcast %3 : vector<1x64xf32> to vector<64x64xf32>
    %5 = arith.addf %2, %4 : vector<64x64xf32>
    %cst_5 = arith.constant 0.707106769 : f32
    %6 = vector.broadcast %cst_5 : f32 to vector<64x64xf32>
    %7 = arith.mulf %5, %6 : vector<64x64xf32>
    %8 = math.absf %7 : vector<64x64xf32>
    %cst_6 = arith.constant 0.327591091 : f32
    %9 = vector.broadcast %cst_6 : f32 to vector<64x64xf32>
    %10 = arith.mulf %9, %8 : vector<64x64xf32>
    %cst_7 = arith.constant 1.000000e+00 : f32
    %11 = vector.broadcast %cst_7 : f32 to vector<64x64xf32>
    %12 = arith.addf %11, %10 : vector<64x64xf32>
    %cst_8 = arith.constant 1.000000e+00 : f32
    %13 = vector.broadcast %cst_8 : f32 to vector<64x64xf32>
    %14 = arith.divf %13, %12 : vector<64x64xf32>
    %cst_9 = arith.constant 1.06140542 : f32
    %15 = vector.broadcast %cst_9 : f32 to vector<64x64xf32>
    %16 = arith.mulf %14, %15 : vector<64x64xf32>
    %cst_10 = arith.constant -1.45315206 : f32
    %17 = vector.broadcast %cst_10 : f32 to vector<64x64xf32>
    %18 = arith.addf %17, %16 : vector<64x64xf32>
    %19 = arith.mulf %14, %18 : vector<64x64xf32>
    %cst_11 = arith.constant 1.42141378 : f32
    %20 = vector.broadcast %cst_11 : f32 to vector<64x64xf32>
    %21 = arith.addf %20, %19 : vector<64x64xf32>
    %22 = arith.mulf %14, %21 : vector<64x64xf32>
    %cst_12 = arith.constant -0.284496725 : f32
    %23 = vector.broadcast %cst_12 : f32 to vector<64x64xf32>
    %24 = arith.addf %23, %22 : vector<64x64xf32>
    %25 = arith.mulf %14, %24 : vector<64x64xf32>
    %cst_13 = arith.constant 0.254829586 : f32
    %26 = vector.broadcast %cst_13 : f32 to vector<64x64xf32>
    %27 = arith.addf %26, %25 : vector<64x64xf32>
    %28 = arith.mulf %14, %27 : vector<64x64xf32>
    %cst_14 = arith.constant 0.000000e+00 : f32
    %29 = vector.broadcast %cst_14 : f32 to vector<64x64xf32>
    %30 = arith.subf %29, %8 : vector<64x64xf32>
    %31 = arith.mulf %30, %8 : vector<64x64xf32>
    %32 = math.exp %31 : vector<64x64xf32>
    %33 = arith.mulf %28, %32 : vector<64x64xf32>
    %cst_15 = arith.constant 1.000000e+00 : f32
    %34 = vector.broadcast %cst_15 : f32 to vector<64x64xf32>
    %35 = arith.subf %34, %33 : vector<64x64xf32>
    %cst_16 = arith.constant 0.000000e+00 : f32
    %36 = vector.broadcast %cst_16 : f32 to vector<64x64xf32>
    %37 = arith.cmpf oge, %7, %36 : vector<64x64xf32>
    %cst_17 = arith.constant 0.000000e+00 : f32
    %38 = vector.broadcast %cst_17 : f32 to vector<64x64xf32>
    %39 = arith.subf %38, %35 : vector<64x64xf32>
    %40 = arith.select %37, %35, %39 : vector<64x64xi1>, vector<64x64xf32>
    %cst_18 = arith.constant 5.000000e-01 : f32
    %41 = vector.broadcast %cst_18 : f32 to vector<64x64xf32>
    %42 = arith.mulf %41, %5 : vector<64x64xf32>
    %cst_19 = arith.constant 1.000000e+00 : f32
    %43 = vector.broadcast %cst_19 : f32 to vector<64x64xf32>
    %44 = arith.addf %43, %40 : vector<64x64xf32>
    %45 = arith.mulf %42, %44 : vector<64x64xf32>
    %c0_20 = arith.constant 0 : index
    %c0_21 = arith.constant 0 : index
    %46 = vector.load %arg4[%c0_20, %c0_21] : memref<64x64xf32, #tpu.memory_space<vmem>>, vector<64x64xf32>
    %cst_22 = arith.constant dense<0.000000e+00> : vector<64x64xf32>
    %47 = tpu.matmul %45, %46, %cst_22 {dimension_numbers = #tpu.dot_dimension_numbers<[1], [0], [0], [1], [0, 0, 1, 1], [], []>} : vector<64x64xf32>, vector<64x64xf32>, vector<64x64xf32> -> vector<64x64xf32>
    %c0_23 = arith.constant 0 : index
    %c0_24 = arith.constant 0 : index
    %48 = vector.load %arg5[%c0_23, %c0_24] : memref<1x64xf32, #tpu.memory_space<vmem>>, vector<1x64xf32>
    %49 = vector.broadcast %48 : vector<1x64xf32> to vector<64x64xf32>
    %50 = arith.addf %47, %49 : vector<64x64xf32>
    %c0_25 = arith.constant 0 : index
    %c0_26 = arith.constant 0 : index
    %51 = vector.load %arg6[%c0_25, %c0_26] : memref<64x64xf32, #tpu.memory_space<vmem>>, vector<64x64xf32>
    tpu.vector_store %arg6[%c0_25, %c0_26], %50 {strides = array<i32>} : memref<64x64xf32, #tpu.memory_space<vmem>>, vector<64x64xf32>,
    return
  }
  func.func @transform_0(%arg0: i32) -> (i32, i32) {
    %c0_i32 = arith.constant 0 : i32
    %c0_i32_0 = arith.constant 0 : i32
    return %arg0, %c0_i32 : i32, i32
  }
  func.func @transform_1(%arg0: i32) -> (i32, i32) {
    %c0_i32 = arith.constant 0 : i32
    %c0_i32_0 = arith.constant 0 : i32
    %c0_i32_1 = arith.constant 0 : i32
    return %c0_i32, %c0_i32_0 : i32, i32
  }
  func.func @transform_2(%arg0: i32) -> (i32, i32) {
    %c0_i32 = arith.constant 0 : i32
    %c0_i32_0 = arith.constant 0 : i32
    %c0_i32_1 = arith.constant 0 : i32
    return %c0_i32, %c0_i32_0 : i32, i32
  }
  func.func @transform_3(%arg0: i32) -> (i32, i32) {
    %c0_i32 = arith.constant 0 : i32
    %c0_i32_0 = arith.constant 0 : i32
    %c0_i32_1 = arith.constant 0 : i32
    return %c0_i32, %c0_i32_0 : i32, i32
  }
  func.func @transform_4(%arg0: i32) -> (i32, i32) {
    %c0_i32 = arith.constant 0 : i32
    %c0_i32_0 = arith.constant 0 : i32
    %c0_i32_1 = arith.constant 0 : i32
    return %c0_i32, %c0_i32_0 : i32, i32
  }
  func.func @transform_5(%arg0: i32) -> (i32, i32) {
    %c0_i32 = arith.constant 0 : i32
    %c0_i32_0 = arith.constant 0 : i32
    return %arg0, %c0_i32 : i32, i32
  }
}

</mosaic_0001>

<llo_original>
// kernel: tpu_custom_call.1
$region0: #{tpu_custom_call.1}
  #allocation0 [shape = 'u32[]', space=smem, size = 0x4, offset = 0x4, fixed_abs, tag = 'smem constant byte address 0x4 - core index']
  #allocation1 [shape = 'u32[72,128]{1,0:T(1,128)}', space=vmem, size = 0x9000, scoped, tag = 'internal scratch']
  %s0 = inlined_call_operand.vmem [shape: f32[128,32], index: 0, kind: input, shape index: {}]
  %s1 = inlined_call_operand.vmem [shape: f32[32,64], index: 1, kind: input, shape index: {}]
  %s2 = inlined_call_operand.vmem [shape: f32[1,64], index: 2, kind: input, shape index: {}]
  %s3 = inlined_call_operand.vmem [shape: f32[64,64], index: 3, kind: input, shape index: {}]
  %s4 = inlined_call_operand.vmem [shape: f32[1,64], index: 4, kind: input, shape index: {}]
  %s5 = inlined_call_operand.vmem [shape: f32[128,64], index: 5, kind: output, shape index: {}]
  %s6 = sld [smem:[#allocation0]]
  $region53: #{tpu_custom_call.1} parent=0
    _
  %s8 = ssub.s32 1, %s6
  %s9 = scalar_select 0, %s8, %s6
  loop: start=0, step=1, limit=4
  $region2: #{tpu_custom_call.1} parent=0 // loop_pre_header
    _
  $region3: #{tpu_custom_call.1} parent=0 // loop_header
    %s11 = sphi 0, %s15
    %p12 = scmp.ge.s32.totalorder %s11, 4
    %s21 = sphi 0, %s23
    %s24 = sphi 0, %s21
    %s25 = sphi 0, %s24
    %s41 = sphi 0, %s25
    %s45 = sphi 0, %s45
    %s47 = sphi 0, %s45
    %s48 = sphi 0, %s47
    %s62 = sphi 0, %s48
    %s66 = sphi 0, %s66
    %s68 = sphi 0, %s66
    %s69 = sphi 0, %s68
    %s83 = sphi 0, %s69
    %s87 = sphi 0, %s87
    %s89 = sphi 0, %s87
    %s90 = sphi 0, %s89
    %s104 = sphi 0, %s90
    %s108 = sphi 0, %s108
    %s110 = sphi 0, %s108
    %s111 = sphi 0, %s110
    %s125 = sphi 0, %s111
    %s131 = sphi 0, %s133
    %s134 = sphi 0, %s131
    %s135 = sphi 0, %s134
    %s151 = sphi 0, %s135
  $region4: #{tpu_custom_call.1} parent=0 // loop_header_branch
    %14 = sbr.rel (%p12) target = $region8
  $region5: #{tpu_custom_call.1} parent=0 // loop_body
    %s16 = ssub.s32 %s11, 1
    %s17 = ssub.s32 %s11, 2
    %s18 = sadd.s32 %s11, 1
    %s19 = ssub.s32 %s11, %s18
    %p20 = scmp.eq.s32.totalorder %s19, 0
    %s22 = sadd.s32 %s21, 1
    %s23 = scalar_select %p20, %s21, %s22
    %p26 = pneg %p20
    %p27 = scmp.eq.s32.totalorder %s11, 1
    %p28 = por %p26, %p27
    %p29 = scmp.ne.s32.totalorder %s21, %s24
    %p30 = scmp.eq.s32.totalorder %s11, 0
    %p31 = por %p29, %p30
    %p32 = scmp.ne.s32.totalorder %s21, %s24
    %p33 = scmp.eq.s32.totalorder %s16, 1
    %p34 = por %p32, %p33
    %p35 = scmp.ne.s32.totalorder %s24, %s25
    %p36 = scmp.eq.s32.totalorder %s16, 0
    %p37 = por %p35, %p36
    %p38 = scmp.ne.s32.totalorder %s24, %s25
    %p39 = scmp.eq.s32.totalorder %s17, 1
    %p40 = por %p38, %p39
    %p42 = scmp.ne.s32.totalorder %s25, %s41
    %p43 = scmp.eq.s32.totalorder %s17, 0
    %p44 = por %p42, %p43
    %s46 = sadd.s32 %s45, 1
    %p49 = scmp.eq.s32.totalorder %s11, 1
    %p50 = scmp.ne.s32.totalorder %s45, %s47
    %p51 = scmp.eq.s32.totalorder %s11, 0
    %p52 = por %p50, %p51
    %p53 = scmp.ne.s32.totalorder %s45, %s47
    %p54 = scmp.eq.s32.totalorder %s16, 1
    %p55 = por %p53, %p54
    %p56 = scmp.ne.s32.totalorder %s47, %s48
    %p57 = scmp.eq.s32.totalorder %s16, 0
    %p58 = por %p56, %p57
    %p59 = scmp.ne.s32.totalorder %s47, %s48
    %p60 = scmp.eq.s32.totalorder %s17, 1
    %p61 = por %p59, %p60
    %p63 = scmp.ne.s32.totalorder %s48, %s62
    %p64 = scmp.eq.s32.totalorder %s17, 0
    %p65 = por %p63, %p64
    %s67 = sadd.s32 %s66, 1
    %p70 = scmp.eq.s32.totalorder %s11, 1
    %p71 = scmp.ne.s32.totalorder %s66, %s68
    %p72 = scmp.eq.s32.totalorder %s11, 0
    %p73 = por %p71, %p72
    %p74 = scmp.ne.s32.totalorder %s66, %s68
    %p75 = scmp.eq.s32.totalorder %s16, 1
    %p76 = por %p74, %p75
    %p77 = scmp.ne.s32.totalorder %s68, %s69
    %p78 = scmp.eq.s32.totalorder %s16, 0
    %p79 = por %p77, %p78
    %p80 = scmp.ne.s32.totalorder %s68, %s69
    %p81 = scmp.eq.s32.totalorder %s17, 1
    %p82 = por %p80, %p81
    %p84 = scmp.ne.s32.totalorder %s69, %s83
    %p85 = scmp.eq.s32.totalorder %s17, 0
    %p86 = por %p84, %p85
    %s88 = sadd.s32 %s87, 1
    %p91 = scmp.eq.s32.totalorder %s11, 1
    %p92 = scmp.ne.s32.totalorder %s87, %s89
    %p93 = scmp.eq.s32.totalorder %s11, 0
    %p94 = por %p92, %p93
    %p95 = scmp.ne.s32.totalorder %s87, %s89
    %p96 = scmp.eq.s32.totalorder %s16, 1
    %p97 = por %p95, %p96
    %p98 = scmp.ne.s32.totalorder %s89, %s90
    %p99 = scmp.eq.s32.totalorder %s16, 0
    %p100 = por %p98, %p99
    %p101 = scmp.ne.s32.totalorder %s89, %s90
    %p102 = scmp.eq.s32.totalorder %s17, 1
    %p103 = por %p101, %p102
    %p105 = scmp.ne.s32.totalorder %s90, %s104
    %p106 = scmp.eq.s32.totalorder %s17, 0
    %p107 = por %p105, %p106
    %s109 = sadd.s32 %s108, 1
    %p112 = scmp.eq.s32.totalorder %s11, 1
    %p113 = scmp.ne.s32.totalorder %s108, %s110
    %p114 = scmp.eq.s32.totalorder %s11, 0
    %p115 = por %p113, %p114
    %p116 = scmp.ne.s32.totalorder %s108, %s110
    %p117 = scmp.eq.s32.totalorder %s16, 1
    %p118 = por %p116, %p117
    %p119 = scmp.ne.s32.totalorder %s110, %s111
    %p120 = scmp.eq.s32.totalorder %s16, 0
    %p121 = por %p119, %p120
    %p122 = scmp.ne.s32.totalorder %s110, %s111
    %p123 = scmp.eq.s32.totalorder %s17, 1
    %p124 = por %p122, %p123
    %p126 = scmp.ne.s32.totalorder %s111, %s125
    %p127 = scmp.eq.s32.totalorder %s17, 0
    %p128 = por %p126, %p127
    %s129 = ssub.s32 %s11, %s18
    %p130 = scmp.eq.s32.totalorder %s129, 0
    %s132 = sadd.s32 %s131, 1
    %s133 = scalar_select %p130, %s131, %s132
    %p136 = pneg %p130
    %p137 = scmp.eq.s32.totalorder %s11, 1
    %p138 = por %p136, %p137
    %p139 = scmp.ne.s32.totalorder %s131, %s134
    %p140 = scmp.eq.s32.totalorder %s11, 0
    %p141 = por %p139, %p140
    %p142 = scmp.ne.s32.totalorder %s131, %s134
    %p143 = scmp.eq.s32.totalorder %s16, 1
    %p144 = por %p142, %p143
    %p145 = scmp.ne.s32.totalorder %s134, %s135
    %p146 = scmp.eq.s32.totalorder %s16, 0
    %p147 = por %p145, %p146
    %p148 = scmp.ne.s32.totalorder %s134, %s135
    %p149 = scmp.eq.s32.totalorder %s17, 1
    %p150 = por %p148, %p149
    %p152 = scmp.ne.s32.totalorder %s135, %s151
    %p153 = scmp.eq.s32.totalorder %s17, 0
    %p154 = por %p152, %p153
    %p155 = scmp.le.s32.totalorder 1, %s11
    %p156 = scmp.lt.s32.totalorder %s11, 3
    %p157 = pnand %p155, %p156
    %p158 = pneg %p157
    // Predicated region
    $region9: #{tpu_custom_call.1} parent=5 // pred_check
      _
    $region10: #{tpu_custom_call.1} parent=5 // pred_check_branch
      %160 = sbr.rel (%p157) target = $region12
    $region11: #{tpu_custom_call.1} parent=5 // pred_region
      %s161 = ssub.s32 %s11, 1
      // Predicated region
      $region13: #{tpu_custom_call.1} parent=11 // pred_check
        %p162 = pneg %p58
      $region14: #{tpu_custom_call.1} parent=11 // pred_check_branch
        %164 = sbr.rel (%p162) target = $region16
      $region15: #{tpu_custom_call.1} parent=11 // pred_region
        _
      $region16: #{tpu_custom_call.1} parent=11 // pred_fallthru
        _
      // Predicated region
      $region17: #{tpu_custom_call.1} parent=11 // pred_check
        %p165 = pneg %p79
      $region18: #{tpu_custom_call.1} parent=11 // pred_check_branch
        %167 = sbr.rel (%p165) target = $region20
      $region19: #{tpu_custom_call.1} parent=11 // pred_region
        _
      $region20: #{tpu_custom_call.1} parent=11 // pred_fallthru
        _
      // Predicated region
      $region21: #{tpu_custom_call.1} parent=11 // pred_check
        %p168 = pneg %p100
      $region22: #{tpu_custom_call.1} parent=11 // pred_check_branch
        %170 = sbr.rel (%p168) target = $region24
      $region23: #{tpu_custom_call.1} parent=11 // pred_region
        _
      $region24: #{tpu_custom_call.1} parent=11 // pred_fallthru
        _
      // Predicated region
      $region25: #{tpu_custom_call.1} parent=11 // pred_check
        %p171 = pneg %p121
      $region26: #{tpu_custom_call.1} parent=11 // pred_check_branch
        %173 = sbr.rel (%p171) target = $region28
      $region27: #{tpu_custom_call.1} parent=11 // pred_region
        _
      $region28: #{tpu_custom_call.1} parent=11 // pred_fallthru
        _
    $region12: #{tpu_custom_call.1} parent=5 // pred_fallthru
      _
    %p174 = scmp.lt.s32.totalorder %s11, 2
    // Predicated region
    $region29: #{tpu_custom_call.1} parent=5 // pred_check
      %p175 = pneg %p174
    $region30: #{tpu_custom_call.1} parent=5 // pred_check_branch
      %177 = sbr.rel (%p175) target = $region32
    $region31: #{tpu_custom_call.1} parent=5 // pred_region
      // Predicated region
      $region33: #{tpu_custom_call.1} parent=31 // pred_check
        %p178 = pneg %p31
      $region34: #{tpu_custom_call.1} parent=31 // pred_check_branch
        %180 = sbr.rel (%p178) target = $region36
      $region35: #{tpu_custom_call.1} parent=31 // pred_region
        %s181 = smul.u32 8, %s11
        %p182 = scmp.lt.s32.totalorder %s181, 15
        %s183 = scalar_select %p182, %s181, 15
        %s184 = smul.addr %s183, 8
        %s185 = scalar_lea.vmem %s0, %s184
        %s186 = smul.u32 8, %s11
      $region36: #{tpu_custom_call.1} parent=31 // pred_fallthru
        _
    $region32: #{tpu_custom_call.1} parent=5 // pred_fallthru
      _
    %p187 = scmp.le.s32.totalorder 1, %s11
    %p188 = scmp.lt.s32.totalorder %s11, 3
    %p189 = pnand %p187, %p188
    %p190 = pneg %p189
    // Predicated region
    $region37: #{tpu_custom_call.1} parent=5 // pred_check
      _
    $region38: #{tpu_custom_call.1} parent=5 // pred_check_branch
      %192 = sbr.rel (%p189) target = $region40
    $region39: #{tpu_custom_call.1} parent=5 // pred_region
      %s193 = ssub.s32 %s11, 1
      %s194 = smul.u32 8, %s16
      %p195 = scmp.lt.s32.totalorder %s194, 15
      %s196 = scalar_select %p195, %s194, 15
      %s197 = smul.addr %s196, 8
      %s198 = scalar_lea.vmem %s0, %s197
      %p199 = pneg %p37
      %p200 = pneg %p34
      %p201 = pneg %p58
      %p202 = pneg %p55
      %p203 = pneg %p79
      %p204 = pneg %p76
      %p205 = pneg %p100
      %p206 = pneg %p97
      %p207 = pneg %p121
      %p208 = pneg %p118
      %p209 = pneg %p147
      %p210 = pneg %p144
      %s211 = smul.u32 8, %s16
      %p212 = scmp.lt.s32.totalorder %s211, 15
      %s213 = scalar_select %p212, %s211, 15
      %s214 = smul.addr %s213, 8
      %s215 = scalar_lea.vmem %s5, %s214
      %s216 = smul.u32 8, %s16
      %p217 = scmp.lt.s32.totalorder %s216, 15
      %s218 = scalar_select %p217, %s216, 15
      %s219 = smul.addr %s218, 8
      %s220 = scalar_lea.vmem %s0, %s219
      %s221 = smul.u32 8, %s16
      %s222 = smul.u32 8, %s16
      %p223 = scmp.lt.s32.totalorder %s222, 15
      %s224 = scalar_select %p223, %s222, 15
      %s225 = smul.addr %s224, 8
      %s226 = scalar_lea.vmem %s5, %s225
      %s227 = smul.u32 8, %s16
      %v228 = vld [vmem:[%s220] sm:$0xff]
      %v229 = vld [vmem:[%s220 + $0x8] sm:$0xff]
      %v230 = vld [vmem:[%s220 + $0x10] sm:$0xff]
      %v231 = vld [vmem:[%s220 + $0x18] sm:$0xff]
      %v232 = vld [vmem:[%s220 + $0x20] sm:$0xff]
      %v233 = vld [vmem:[%s220 + $0x28] sm:$0xff]
      %v234 = vld [vmem:[%s220 + $0x30] sm:$0xff]
      %v235 = vld [vmem:[%s220 + $0x38] sm:$0xff]
      %v236 = vld [vmem:[%s1] sm:$0xff]
      %v237 = vld [vmem:[%s1 + $0x8] sm:$0xff]
      %v238 = vld [vmem:[%s1 + $0x10] sm:$0xff]
      %v239 = vld [vmem:[%s1 + $0x18] sm:$0xff]
      %v240 = vld [vmem:[%s2] sm:$0x1]
      %v242 = vperm.slane %v240, 0
      %vm244 = vcmask 261120
      %v246 = vsel %vm244, %v228, 0
      %v249 = vsel %vm244, %v229, 0
      %v252 = vsel %vm244, %v230, 0
      %v255 = vsel %vm244, %v231, 0
      %v258 = vsel %vm244, %v232, 0
      %v261 = vsel %vm244, %v233, 0
      %v264 = vsel %vm244, %v234, 0
      %v267 = vsel %vm244, %v235, 0
      %269 = vmatpush.msra.mxu0 0.0
      %270 = vmatpush.msra.mxu0 0.0
      %271 = vmatpush.msra.mxu0 0.0
      %272 = vmatpush.msra.mxu0 0.0
      %273 = vmatpush.msra.mxu0 0.0
      %274 = vmatpush.msra.mxu0 0.0
      %275 = vmatpush.msra.mxu0 0.0
      %276 = vmatpush.msra.mxu0 0.0
      %277 = vmatpush.msra.mxu0 0.0
      %278 = vmatpush.msra.mxu0 0.0
      %279 = vmatpush.msra.mxu0 0.0
      %280 = vmatpush.msra.mxu0 0.0
      %281 = vmatpush.msra.mxu0 %v239
      %282 = vmatpush.msra.mxu0 %v238
      %283 = vmatpush.msra.mxu0 %v237
      %284 = vmatpush.msra.mxu0 %v236
      %285 = vmatmul.f32.gmra.mxu0 %v246
      %v286 = vpop.f32.mrf.mxu0
      %v287 = vadd.f32 %v242, %v286
      %288 = vmatmul.f32.gmra.mxu0 %v249
      %v289 = vpop.f32.mrf.mxu0
      %v290 = vadd.f32 %v242, %v289
      %291 = vmatmul.f32.gmra.mxu0 %v252
      %v292 = vpop.f32.mrf.mxu0
      %v293 = vadd.f32 %v242, %v292
      %294 = vmatmul.f32.gmra.mxu0 %v255
      %v295 = vpop.f32.mrf.mxu0
      %v296 = vadd.f32 %v242, %v295
      %297 = vmatmul.f32.gmra.mxu0 %v258
      %v298 = vpop.f32.mrf.mxu0
      %v299 = vadd.f32 %v242, %v298
      %300 = vmatmul.f32.gmra.mxu0 %v261
      %v301 = vpop.f32.mrf.mxu0
      %v302 = vadd.f32 %v242, %v301
      %303 = vmatmul.f32.gmra.mxu0 %v264
      %v304 = vpop.f32.mrf.mxu0
      %v305 = vadd.f32 %v242, %v304
      %306 = vmatmul.f32.gmra.mxu0 %v267
      %v307 = vpop.f32.mrf.mxu0
      %v308 = vadd.f32 %v242, %v307
      %309 = vdwg.mxu0
      %v310 = vmul.f32 %v287, 0.70710677
      %v311 = vmul.f32 %v290, 0.70710677
      %v312 = vmul.f32 %v293, 0.70710677
      %v313 = vmul.f32 %v296, 0.70710677
      %v314 = vmul.f32 %v299, 0.70710677
      %v315 = vmul.f32 %v302, 0.70710677
      %v316 = vmul.f32 %v305, 0.70710677
      %v317 = vmul.f32 %v308, 0.70710677
      %v318 = vand.u32 2147483647, %v310
      %v319 = vand.u32 2147483647, %v311
      %v320 = vand.u32 2147483647, %v312
      %v321 = vand.u32 2147483647, %v313
      %v322 = vand.u32 2147483647, %v314
      %v323 = vand.u32 2147483647, %v315
      %v324 = vand.u32 2147483647, %v316
      %v325 = vand.u32 2147483647, %v317
      %v326 = vmul.f32 %v318, 0.3275911
      %v327 = vmul.f32 %v319, 0.3275911
      %v328 = vmul.f32 %v320, 0.3275911
      %v329 = vmul.f32 %v321, 0.3275911
      %v330 = vmul.f32 %v322, 0.3275911
      %v331 = vmul.f32 %v323, 0.3275911
      %v332 = vmul.f32 %v324, 0.3275911
      %v333 = vmul.f32 %v325, 0.3275911
      %v334 = vadd.f32 %v326, 1.0
      %v335 = vadd.f32 %v327, 1.0
      %v336 = vadd.f32 %v328, 1.0
      %v337 = vadd.f32 %v329, 1.0
      %v338 = vadd.f32 %v330, 1.0
      %v339 = vadd.f32 %v331, 1.0
      %v340 = vadd.f32 %v332, 1.0
      %v341 = vadd.f32 %v333, 1.0
      %v342 = vrcp.pop %v334
      %v343 = vmul.f32 %v334, %v342
      %v344 = vsub.f32 1.0, %v343
      %v345 = vmul.f32 %v342, %v344
      %v346 = vadd.f32 %v342, %v345
      %vm347 = vweird.f32 %v334
      %vm348 = vweird.f32 %v342
      %vm349 = vmor %vm347, %vm348
      %v350 = vsel %vm349, %v342, %v346
      %v351 = vand.u32 2147483647, %v334
      %vm352 = vcmp.eq.f32.partialorder %v351, 8.507059e+37
      %v353 = vand.u32 %v334, 2147483648
      %v354 = vor.u32 1.1754944e-38, %v353
      %v355 = vsel %vm352, %v354, %v350
      %v356 = vmul.f32 1.0, %v355
      %v357 = vrcp.pop %v335
      %v358 = vmul.f32 %v335, %v357
      %v359 = vsub.f32 1.0, %v358
      %v360 = vmul.f32 %v357, %v359
      %v361 = vadd.f32 %v357, %v360
      %vm362 = vweird.f32 %v335
      %vm363 = vweird.f32 %v357
      %vm364 = vmor %vm362, %vm363
      %v365 = vsel %vm364, %v357, %v361
      %v366 = vand.u32 2147483647, %v335
      %vm367 = vcmp.eq.f32.partialorder %v366, 8.507059e+37
      %v368 = vand.u32 %v335, 2147483648
      %v369 = vor.u32 1.1754944e-38, %v368
      %v370 = vsel %vm367, %v369, %v365
      %v371 = vmul.f32 1.0, %v370
      %v372 = vrcp.pop %v336
      %v373 = vmul.f32 %v336, %v372
      %v374 = vsub.f32 1.0, %v373
      %v375 = vmul.f32 %v372, %v374
      %v376 = vadd.f32 %v372, %v375
      %vm377 = vweird.f32 %v336
      %vm378 = vweird.f32 %v372
      %vm379 = vmor %vm377, %vm378
      %v380 = vsel %vm379, %v372, %v376
      %v381 = vand.u32 2147483647, %v336
      %vm382 = vcmp.eq.f32.partialorder %v381, 8.507059e+37
      %v383 = vand.u32 %v336, 2147483648
      %v384 = vor.u32 1.1754944e-38, %v383
      %v385 = vsel %vm382, %v384, %v380
      %v386 = vmul.f32 1.0, %v385
      %v387 = vrcp.pop %v337
      %v388 = vmul.f32 %v337, %v387
      %v389 = vsub.f32 1.0, %v388
      %v390 = vmul.f32 %v387, %v389
      %v391 = vadd.f32 %v387, %v390
      %vm392 = vweird.f32 %v337
      %vm393 = vweird.f32 %v387
      %vm394 = vmor %vm392, %vm393
      %v395 = vsel %vm394, %v387, %v391
      %v396 = vand.u32 2147483647, %v337
      %vm397 = vcmp.eq.f32.partialorder %v396, 8.507059e+37
      %v398 = vand.u32 %v337, 2147483648
      %v399 = vor.u32 1.1754944e-38, %v398
      %v400 = vsel %vm397, %v399, %v395
      %v401 = vmul.f32 1.0, %v400
      %v402 = vrcp.pop %v338
      %v403 = vmul.f32 %v338, %v402
      %v404 = vsub.f32 1.0, %v403
      %v405 = vmul.f32 %v402, %v404
      %v406 = vadd.f32 %v402, %v405
      %vm407 = vweird.f32 %v338
      %vm408 = vweird.f32 %v402
      %vm409 = vmor %vm407, %vm408
      %v410 = vsel %vm409, %v402, %v406
      %v411 = vand.u32 2147483647, %v338
      %vm412 = vcmp.eq.f32.partialorder %v411, 8.507059e+37
      %v413 = vand.u32 %v338, 2147483648
      %v414 = vor.u32 1.1754944e-38, %v413
      %v415 = vsel %vm412, %v414, %v410
      %v416 = vmul.f32 1.0, %v415
      %v417 = vrcp.pop %v339
      %v418 = vmul.f32 %v339, %v417
      %v419 = vsub.f32 1.0, %v418
      %v420 = vmul.f32 %v417, %v419
      %v421 = vadd.f32 %v417, %v420
      %vm422 = vweird.f32 %v339
      %vm423 = vweird.f32 %v417
      %vm424 = vmor %vm422, %vm423
      %v425 = vsel %vm424, %v417, %v421
      %v426 = vand.u32 2147483647, %v339
      %vm427 = vcmp.eq.f32.partialorder %v426, 8.507059e+37
      %v428 = vand.u32 %v339, 2147483648
      %v429 = vor.u32 1.1754944e-38, %v428
      %v430 = vsel %vm427, %v429, %v425
      %v431 = vmul.f32 1.0, %v430
      %v432 = vrcp.pop %v340
      %v433 = vmul.f32 %v340, %v432
      %v434 = vsub.f32 1.0, %v433
      %v435 = vmul.f32 %v432, %v434
      %v436 = vadd.f32 %v432, %v435
      %vm437 = vweird.f32 %v340
      %vm438 = vweird.f32 %v432
      %vm439 = vmor %vm437, %vm438
      %v440 = vsel %vm439, %v432, %v436
      %v441 = vand.u32 2147483647, %v340
      %vm442 = vcmp.eq.f32.partialorder %v441, 8.507059e+37
      %v443 = vand.u32 %v340, 2147483648
      %v444 = vor.u32 1.1754944e-38, %v443
      %v445 = vsel %vm442, %v444, %v440
      %v446 = vmul.f32 1.0, %v445
      %v447 = vrcp.pop %v341
      %v448 = vmul.f32 %v341, %v447
      %v449 = vsub.f32 1.0, %v448
      %v450 = vmul.f32 %v447, %v449
      %v451 = vadd.f32 %v447, %v450
      %vm452 = vweird.f32 %v341
      %vm453 = vweird.f32 %v447
      %vm454 = vmor %vm452, %vm453
      %v455 = vsel %vm454, %v447, %v451
      %v456 = vand.u32 2147483647, %v341
      %vm457 = vcmp.eq.f32.partialorder %v456, 8.507059e+37
      %v458 = vand.u32 %v341, 2147483648
      %v459 = vor.u32 1.1754944e-38, %v458
      %v460 = vsel %vm457, %v459, %v455
      %v461 = vmul.f32 1.0, %v460
      %v462 = vmul.f32 %v356, 1.0614054
      %v463 = vmul.f32 %v371, 1.0614054
      %v464 = vmul.f32 %v386, 1.0614054
      %v465 = vmul.f32 %v401, 1.0614054
      %v466 = vmul.f32 %v416, 1.0614054
      %v467 = vmul.f32 %v431, 1.0614054
      %v468 = vmul.f32 %v446, 1.0614054
      %v469 = vmul.f32 %v461, 1.0614054
      %v470 = vadd.f32 %v462, -1.4531521
      %v471 = vadd.f32 %v463, -1.4531521
      %v472 = vadd.f32 %v464, -1.4531521
      %v473 = vadd.f32 %v465, -1.4531521
      %v474 = vadd.f32 %v466, -1.4531521
      %v475 = vadd.f32 %v467, -1.4531521
      %v476 = vadd.f32 %v468, -1.4531521
      %v477 = vadd.f32 %v469, -1.4531521
      %v478 = vmul.f32 %v356, %v470
      %v479 = vmul.f32 %v371, %v471
      %v480 = vmul.f32 %v386, %v472
      %v481 = vmul.f32 %v401, %v473
      %v482 = vmul.f32 %v416, %v474
      %v483 = vmul.f32 %v431, %v475
      %v484 = vmul.f32 %v446, %v476
      %v485 = vmul.f32 %v461, %v477
      %v486 = vadd.f32 %v478, 1.4214138
      %v487 = vadd.f32 %v479, 1.4214138
      %v488 = vadd.f32 %v480, 1.4214138
      %v489 = vadd.f32 %v481, 1.4214138
      %v490 = vadd.f32 %v482, 1.4214138
      %v491 = vadd.f32 %v483, 1.4214138
      %v492 = vadd.f32 %v484, 1.4214138
      %v493 = vadd.f32 %v485, 1.4214138
      %v494 = vmul.f32 %v356, %v486
      %v495 = vmul.f32 %v371, %v487
      %v496 = vmul.f32 %v386, %v488
      %v497 = vmul.f32 %v401, %v489
      %v498 = vmul.f32 %v416, %v490
      %v499 = vmul.f32 %v431, %v491
      %v500 = vmul.f32 %v446, %v492
      %v501 = vmul.f32 %v461, %v493
      %v502 = vadd.f32 %v494, -0.28449672
      %v503 = vadd.f32 %v495, -0.28449672
      %v504 = vadd.f32 %v496, -0.28449672
      %v505 = vadd.f32 %v497, -0.28449672
      %v506 = vadd.f32 %v498, -0.28449672
      %v507 = vadd.f32 %v499, -0.28449672
      %v508 = vadd.f32 %v500, -0.28449672
      %v509 = vadd.f32 %v501, -0.28449672
      %v510 = vmul.f32 %v356, %v502
      %v511 = vmul.f32 %v371, %v503
      %v512 = vmul.f32 %v386, %v504
      %v513 = vmul.f32 %v401, %v505
      %v514 = vmul.f32 %v416, %v506
      %v515 = vmul.f32 %v431, %v507
      %v516 = vmul.f32 %v446, %v508
      %v517 = vmul.f32 %v461, %v509
      %v518 = vadd.f32 %v510, 0.2548296
      %v519 = vadd.f32 %v511, 0.2548296
      %v520 = vadd.f32 %v512, 0.2548296
      %v521 = vadd.f32 %v513, 0.2548296
      %v522 = vadd.f32 %v514, 0.2548296
      %v523 = vadd.f32 %v515, 0.2548296
      %v524 = vadd.f32 %v516, 0.2548296
      %v525 = vadd.f32 %v517, 0.2548296
      %v526 = vmul.f32 %v356, %v518
      %v527 = vmul.f32 %v371, %v519
      %v528 = vmul.f32 %v386, %v520
      %v529 = vmul.f32 %v401, %v521
      %v530 = vmul.f32 %v416, %v522
      %v531 = vmul.f32 %v431, %v523
      %v532 = vmul.f32 %v446, %v524
      %v533 = vmul.f32 %v461, %v525
      %v534 = vsub.f32 0.0, %v318
      %v535 = vsub.f32 0.0, %v319
      %v536 = vsub.f32 0.0, %v320
      %v537 = vsub.f32 0.0, %v321
      %v538 = vsub.f32 0.0, %v322
      %v539 = vsub.f32 0.0, %v323
      %v540 = vsub.f32 0.0, %v324
      %v541 = vsub.f32 0.0, %v325
      %v542 = vmul.f32 %v534, %v318
      %v543 = vmul.f32 %v535, %v319
      %v544 = vmul.f32 %v536, %v320
      %v545 = vmul.f32 %v537, %v321
      %v546 = vmul.f32 %v538, %v322
      %v547 = vmul.f32 %v539, %v323
      %v548 = vmul.f32 %v540, %v324
      %v549 = vmul.f32 %v541, %v325
      %v550 = vmul.f32 %v542, 1.442695
      %v551 = vpow.pop %v550
      %v552 = vmul.f32 %v543, 1.442695
      %v553 = vpow.pop %v552
      %v554 = vmul.f32 %v544, 1.442695
      %v555 = vpow.pop %v554
      %v556 = vmul.f32 %v545, 1.442695
      %v557 = vpow.pop %v556
      %v558 = vmul.f32 %v546, 1.442695
      %v559 = vpow.pop %v558
      %v560 = vmul.f32 %v547, 1.442695
      %v561 = vpow.pop %v560
      %v562 = vmul.f32 %v548, 1.442695
      %v563 = vpow.pop %v562
      %v564 = vmul.f32 %v549, 1.442695
      %v565 = vpow.pop %v564
      %v566 = vmul.f32 %v526, %v551
      %v567 = vmul.f32 %v527, %v553
      %v568 = vmul.f32 %v528, %v555
      %v569 = vmul.f32 %v529, %v557
      %v570 = vmul.f32 %v530, %v559
      %v571 = vmul.f32 %v531, %v561
      %v572 = vmul.f32 %v532, %v563
      %v573 = vmul.f32 %v533, %v565
      %v574 = vsub.f32 1.0, %v566
      %v575 = vsub.f32 1.0, %v567
      %v576 = vsub.f32 1.0, %v568
      %v577 = vsub.f32 1.0, %v569
      %v578 = vsub.f32 1.0, %v570
      %v579 = vsub.f32 1.0, %v571
      %v580 = vsub.f32 1.0, %v572
      %v581 = vsub.f32 1.0, %v573
      %vm582 = vcmp.ge.f32.partialorder %v310, 0.0
      %vm583 = vcmp.ge.f32.partialorder %v311, 0.0
      %vm584 = vcmp.ge.f32.partialorder %v312, 0.0
      %vm585 = vcmp.ge.f32.partialorder %v313, 0.0
      %vm586 = vcmp.ge.f32.partialorder %v314, 0.0
      %vm587 = vcmp.ge.f32.partialorder %v315, 0.0
      %vm588 = vcmp.ge.f32.partialorder %v316, 0.0
      %vm589 = vcmp.ge.f32.partialorder %v317, 0.0
      %v590 = vsub.f32 0.0, %v574
      %v591 = vsub.f32 0.0, %v575
      %v592 = vsub.f32 0.0, %v576
      %v593 = vsub.f32 0.0, %v577
      %v594 = vsub.f32 0.0, %v578
      %v595 = vsub.f32 0.0, %v579
      %v596 = vsub.f32 0.0, %v580
      %v597 = vsub.f32 0.0, %v581
      %v598 = vsel %vm582, %v574, %v590
      %v599 = vsel %vm583, %v575, %v591
      %v600 = vsel %vm584, %v576, %v592
      %v601 = vsel %vm585, %v577, %v593
      %v602 = vsel %vm586, %v578, %v594
      %v603 = vsel %vm587, %v579, %v595
      %v604 = vsel %vm588, %v580, %v596
      %v605 = vsel %vm589, %v581, %v597
      %v606 = vmul.f32 %v287, 0.5
      %v607 = vmul.f32 %v290, 0.5
      %v608 = vmul.f32 %v293, 0.5
      %v609 = vmul.f32 %v296, 0.5
      %v610 = vmul.f32 %v299, 0.5
      %v611 = vmul.f32 %v302, 0.5
      %v612 = vmul.f32 %v305, 0.5
      %v613 = vmul.f32 %v308, 0.5
      %v614 = vadd.f32 %v598, 1.0
      %v615 = vadd.f32 %v599, 1.0
      %v616 = vadd.f32 %v600, 1.0
      %v617 = vadd.f32 %v601, 1.0
      %v618 = vadd.f32 %v602, 1.0
      %v619 = vadd.f32 %v603, 1.0
      %v620 = vadd.f32 %v604, 1.0
      %v621 = vadd.f32 %v605, 1.0
      %v622 = vmul.f32 %v606, %v614
      %v623 = vmul.f32 %v607, %v615
      %v624 = vmul.f32 %v608, %v616
      %v625 = vmul.f32 %v609, %v617
      %v626 = vmul.f32 %v610, %v618
      %v627 = vmul.f32 %v611, %v619
      %v628 = vmul.f32 %v612, %v620
      %v629 = vmul.f32 %v613, %v621
      %v630 = vld [vmem:[%s3] sm:$0xff]
      %v631 = vld [vmem:[%s3 + $0x8] sm:$0xff]
      %v632 = vld [vmem:[%s3 + $0x10] sm:$0xff]
      %v633 = vld [vmem:[%s3 + $0x18] sm:$0xff]
      %v634 = vld [vmem:[%s3 + $0x20] sm:$0xff]
      %v635 = vld [vmem:[%s3 + $0x28] sm:$0xff]
      %v636 = vld [vmem:[%s3 + $0x30] sm:$0xff]
      %v637 = vld [vmem:[%s3 + $0x38] sm:$0xff]
      %v638 = vld [vmem:[%s4] sm:$0x1]
      %v640 = vperm.slane %v638, 0
      %vm642 = vcmask 523264
      %v644 = vsel %vm642, %v622, 0
      %v647 = vsel %vm642, %v623, 0
      %v650 = vsel %vm642, %v624, 0
      %v653 = vsel %vm642, %v625, 0
      %v656 = vsel %vm642, %v626, 0
      %v659 = vsel %vm642, %v627, 0
      %v662 = vsel %vm642, %v628, 0
      %v665 = vsel %vm642, %v629, 0
      %667 = vmatpush.msra.mxu0 0.0
      %668 = vmatpush.msra.mxu0 0.0
      %669 = vmatpush.msra.mxu0 0.0
      %670 = vmatpush.msra.mxu0 0.0
      %671 = vmatpush.msra.mxu0 0.0
      %672 = vmatpush.msra.mxu0 0.0
      %673 = vmatpush.msra.mxu0 0.0
      %674 = vmatpush.msra.mxu0 0.0
      %675 = vmatpush.msra.mxu0 %v637
      %676 = vmatpush.msra.mxu0 %v636
      %677 = vmatpush.msra.mxu0 %v635
      %678 = vmatpush.msra.mxu0 %v634
      %679 = vmatpush.msra.mxu0 %v633
      %680 = vmatpush.msra.mxu0 %v632
      %681 = vmatpush.msra.mxu0 %v631
      %682 = vmatpush.msra.mxu0 %v630
      %683 = vmatmul.f32.gmra.mxu0 %v644
      %v684 = vpop.f32.mrf.mxu0
      %v685 = vadd.f32 %v640, %v684
      %686 = vmatmul.f32.gmra.mxu0 %v647
      %v687 = vpop.f32.mrf.mxu0
      %v688 = vadd.f32 %v640, %v687
      %689 = vmatmul.f32.gmra.mxu0 %v650
      %v690 = vpop.f32.mrf.mxu0
      %v691 = vadd.f32 %v640, %v690
      %692 = vmatmul.f32.gmra.mxu0 %v653
      %v693 = vpop.f32.mrf.mxu0
      %v694 = vadd.f32 %v640, %v693
      %695 = vmatmul.f32.gmra.mxu0 %v656
      %v696 = vpop.f32.mrf.mxu0
      %v697 = vadd.f32 %v640, %v696
      %698 = vmatmul.f32.gmra.mxu0 %v659
      %v699 = vpop.f32.mrf.mxu0
      %v700 = vadd.f32 %v640, %v699
      %701 = vmatmul.f32.gmra.mxu0 %v662
      %v702 = vpop.f32.mrf.mxu0
      %v703 = vadd.f32 %v640, %v702
      %704 = vmatmul.f32.gmra.mxu0 %v665
      %v705 = vpop.f32.mrf.mxu0
      %v706 = vadd.f32 %v640, %v705
      %707 = vdwg.mxu0
      %708 = vst.msk [vmem:[%s226] sm:$0xff] %vm642, %v685
      %709 = vst.msk [vmem:[%s226 + $0x8] sm:$0xff] %vm642, %v688
      %710 = vst.msk [vmem:[%s226 + $0x10] sm:$0xff] %vm642, %v691
      %711 = vst.msk [vmem:[%s226 + $0x18] sm:$0xff] %vm642, %v694
      %712 = vst.msk [vmem:[%s226 + $0x20] sm:$0xff] %vm642, %v697
      %713 = vst.msk [vmem:[%s226 + $0x28] sm:$0xff] %vm642, %v700
      %714 = vst.msk [vmem:[%s226 + $0x30] sm:$0xff] %vm642, %v703
      %715 = vst.msk [vmem:[%s226 + $0x38] sm:$0xff] %vm642, %v706
      %s716 = smul.u32 8, %s16
      %p717 = scmp.lt.s32.totalorder %s716, 15
      %s718 = scalar_select %p717, %s716, 15
      %s719 = smul.addr %s718, 8
      %s720 = scalar_lea.vmem %s5, %s719
      // Predicated region
      $region41: #{tpu_custom_call.1} parent=39 // pred_check
        %p721 = pneg %p144
      $region42: #{tpu_custom_call.1} parent=39 // pred_check_branch
        %723 = sbr.rel (%p721) target = $region44
      $region43: #{tpu_custom_call.1} parent=39 // pred_region
        %s724 = smul.u32 8, %s16
      $region44: #{tpu_custom_call.1} parent=39 // pred_fallthru
        _
    $region40: #{tpu_custom_call.1} parent=5 // pred_fallthru
      _
    %p725 = scmp.le.s32.totalorder 2, %s11
    // Predicated region
    $region45: #{tpu_custom_call.1} parent=5 // pred_check
      %p726 = pneg %p725
    $region46: #{tpu_custom_call.1} parent=5 // pred_check_branch
      %728 = sbr.rel (%p726) target = $region48
    $region47: #{tpu_custom_call.1} parent=5 // pred_region
      %s729 = ssub.s32 %s11, 2
      // Predicated region
      $region49: #{tpu_custom_call.1} parent=47 // pred_check
        %p730 = pneg %p150
      $region50: #{tpu_custom_call.1} parent=47 // pred_check_branch
        %732 = sbr.rel (%p730) target = $region52
      $region51: #{tpu_custom_call.1} parent=47 // pred_region
        %s733 = smul.u32 8, %s17
        %p734 = scmp.lt.s32.totalorder %s733, 15
        %s735 = scalar_select %p734, %s733, 15
        %s736 = smul.addr %s735, 8
        %s737 = scalar_lea.vmem %s5, %s736
      $region52: #{tpu_custom_call.1} parent=47 // pred_fallthru
        _
    $region48: #{tpu_custom_call.1} parent=5 // pred_fallthru
      _
  $region6: #{tpu_custom_call.1} parent=0 // loop_footer
    %s15 = sadd.s32 1, %s11
  $region7: #{tpu_custom_call.1} parent=0 // loop_footer_branch
    %10 = sbr.rel target = $region3
  $region8: #{tpu_custom_call.1} parent=0 // loop_exit
    _

// kernel: tpu_custom_call.1
$region0: #{tpu_custom_call.1}
  #allocation0 [shape = 'u32[]', space=smem, size = 0x4, offset = 0x4, fixed_abs, tag = 'smem constant byte address 0x4 - core index']
  #allocation1 [shape = 'u32[72,128]{1,0:T(1,128)}', space=vmem, size = 0x9000, scoped, tag = 'internal scratch']
  %s0 = inlined_call_operand.vmem [shape: f32[128,32], index: 0, kind: input, shape index: {}]
  %s1 = inlined_call_operand.vmem [shape: f32[32,64], index: 1, kind: input, shape index: {}]
  %s2 = inlined_call_operand.vmem [shape: f32[1,64], index: 2, kind: input, shape index: {}]
  %s3 = inlined_call_operand.vmem [shape: f32[64,64], index: 3, kind: input, shape index: {}]
  %s4 = inlined_call_operand.vmem [shape: f32[1,64], index: 4, kind: input, shape index: {}]
  %s5 = inlined_call_operand.vmem [shape: f32[128,64], index: 5, kind: output, shape index: {}]
  %s6 = sld [smem:[#allocation0]]
  $region53: #{tpu_custom_call.1} parent=0
    _
  %s8 = ssub.s32 1, %s6
  %s9 = scalar_select 0, %s8, %s6
  loop: start=0, step=1, limit=4
  $region2: #{tpu_custom_call.1} parent=0 // loop_pre_header
    _
  $region3: #{tpu_custom_call.1} parent=0 // loop_header
    %s11 = sphi 0, %s15
    %p12 = scmp.ge.s32.totalorder %s11, 4
    %s21 = sphi 0, %s23
    %s24 = sphi 0, %s21
    %s25 = sphi 0, %s24
    %s41 = sphi 0, %s25
    %s45 = sphi 0, %s45
    %s47 = sphi 0, %s45
    %s48 = sphi 0, %s47
    %s62 = sphi 0, %s48
    %s66 = sphi 0, %s66
    %s68 = sphi 0, %s66
    %s69 = sphi 0, %s68
    %s83 = sphi 0, %s69
    %s87 = sphi 0, %s87
    %s89 = sphi 0, %s87
    %s90 = sphi 0, %s89
    %s104 = sphi 0, %s90
    %s108 = sphi 0, %s108
    %s110 = sphi 0, %s108
    %s111 = sphi 0, %s110
    %s125 = sphi 0, %s111
    %s131 = sphi 0, %s133
    %s134 = sphi 0, %s131
    %s135 = sphi 0, %s134
    %s151 = sphi 0, %s135
  $region4: #{tpu_custom_call.1} parent=0 // loop_header_branch
    %14 = sbr.rel (%p12) target = $region8
  $region5: #{tpu_custom_call.1} parent=0 // loop_body
    %s16 = ssub.s32 %s11, 1
    %s17 = ssub.s32 %s11, 2
    %s18 = sadd.s32 %s11, 1
    %s19 = ssub.s32 %s11, %s18
    %p20 = scmp.eq.s32.totalorder %s19, 0
    %s22 = sadd.s32 %s21, 1
    %s23 = scalar_select %p20, %s21, %s22
    %p26 = pneg %p20
    %p27 = scmp.eq.s32.totalorder %s11, 1
    %p28 = por %p26, %p27
    %p29 = scmp.ne.s32.totalorder %s21, %s24
    %p30 = scmp.eq.s32.totalorder %s11, 0
    %p31 = por %p29, %p30
    %p32 = scmp.ne.s32.totalorder %s21, %s24
    %p33 = scmp.eq.s32.totalorder %s16, 1
    %p34 = por %p32, %p33
    %p35 = scmp.ne.s32.totalorder %s24, %s25
    %p36 = scmp.eq.s32.totalorder %s16, 0
    %p37 = por %p35, %p36
    %p38 = scmp.ne.s32.totalorder %s24, %s25
    %p39 = scmp.eq.s32.totalorder %s17, 1
    %p40 = por %p38, %p39
    %p42 = scmp.ne.s32.totalorder %s25, %s41
    %p43 = scmp.eq.s32.totalorder %s17, 0
    %p44 = por %p42, %p43
    %s46 = sadd.s32 %s45, 1
    %p49 = scmp.eq.s32.totalorder %s11, 1
    %p50 = scmp.ne.s32.totalorder %s45, %s47
    %p51 = scmp.eq.s32.totalorder %s11, 0
    %p52 = por %p50, %p51
    %p53 = scmp.ne.s32.totalorder %s45, %s47
    %p54 = scmp.eq.s32.totalorder %s16, 1
    %p55 = por %p53, %p54
    %p56 = scmp.ne.s32.totalorder %s47, %s48
    %p57 = scmp.eq.s32.totalorder %s16, 0
    %p58 = por %p56, %p57
    %p59 = scmp.ne.s32.totalorder %s47, %s48
    %p60 = scmp.eq.s32.totalorder %s17, 1
    %p61 = por %p59, %p60
    %p63 = scmp.ne.s32.totalorder %s48, %s62
    %p64 = scmp.eq.s32.totalorder %s17, 0
    %p65 = por %p63, %p64
    %s67 = sadd.s32 %s66, 1
    %p70 = scmp.eq.s32.totalorder %s11, 1
    %p71 = scmp.ne.s32.totalorder %s66, %s68
    %p72 = scmp.eq.s32.totalorder %s11, 0
    %p73 = por %p71, %p72
    %p74 = scmp.ne.s32.totalorder %s66, %s68
    %p75 = scmp.eq.s32.totalorder %s16, 1
    %p76 = por %p74, %p75
    %p77 = scmp.ne.s32.totalorder %s68, %s69
    %p78 = scmp.eq.s32.totalorder %s16, 0
    %p79 = por %p77, %p78
    %p80 = scmp.ne.s32.totalorder %s68, %s69
    %p81 = scmp.eq.s32.totalorder %s17, 1
    %p82 = por %p80, %p81
    %p84 = scmp.ne.s32.totalorder %s69, %s83
    %p85 = scmp.eq.s32.totalorder %s17, 0
    %p86 = por %p84, %p85
    %s88 = sadd.s32 %s87, 1
    %p91 = scmp.eq.s32.totalorder %s11, 1
    %p92 = scmp.ne.s32.totalorder %s87, %s89
    %p93 = scmp.eq.s32.totalorder %s11, 0
    %p94 = por %p92, %p93
    %p95 = scmp.ne.s32.totalorder %s87, %s89
    %p96 = scmp.eq.s32.totalorder %s16, 1
    %p97 = por %p95, %p96
    %p98 = scmp.ne.s32.totalorder %s89, %s90
    %p99 = scmp.eq.s32.totalorder %s16, 0
    %p100 = por %p98, %p99
    %p101 = scmp.ne.s32.totalorder %s89, %s90
    %p102 = scmp.eq.s32.totalorder %s17, 1
    %p103 = por %p101, %p102
    %p105 = scmp.ne.s32.totalorder %s90, %s104
    %p106 = scmp.eq.s32.totalorder %s17, 0
    %p107 = por %p105, %p106
    %s109 = sadd.s32 %s108, 1
    %p112 = scmp.eq.s32.totalorder %s11, 1
    %p113 = scmp.ne.s32.totalorder %s108, %s110
    %p114 = scmp.eq.s32.totalorder %s11, 0
    %p115 = por %p113, %p114
    %p116 = scmp.ne.s32.totalorder %s108, %s110
    %p117 = scmp.eq.s32.totalorder %s16, 1
    %p118 = por %p116, %p117
    %p119 = scmp.ne.s32.totalorder %s110, %s111
    %p120 = scmp.eq.s32.totalorder %s16, 0
    %p121 = por %p119, %p120
    %p122 = scmp.ne.s32.totalorder %s110, %s111
    %p123 = scmp.eq.s32.totalorder %s17, 1
    %p124 = por %p122, %p123
    %p126 = scmp.ne.s32.totalorder %s111, %s125
    %p127 = scmp.eq.s32.totalorder %s17, 0
    %p128 = por %p126, %p127
    %s129 = ssub.s32 %s11, %s18
    %p130 = scmp.eq.s32.totalorder %s129, 0
    %s132 = sadd.s32 %s131, 1
    %s133 = scalar_select %p130, %s131, %s132
    %p136 = pneg %p130
    %p137 = scmp.eq.s32.totalorder %s11, 1
    %p138 = por %p136, %p137
    %p139 = scmp.ne.s32.totalorder %s131, %s134
    %p140 = scmp.eq.s32.totalorder %s11, 0
    %p141 = por %p139, %p140
    %p142 = scmp.ne.s32.totalorder %s131, %s134
    %p143 = scmp.eq.s32.totalorder %s16, 1
    %p144 = por %p142, %p143
    %p145 = scmp.ne.s32.totalorder %s134, %s135
    %p146 = scmp.eq.s32.totalorder %s16, 0
    %p147 = por %p145, %p146
    %p148 = scmp.ne.s32.totalorder %s134, %s135
    %p149 = scmp.eq.s32.totalorder %s17, 1
    %p150 = por %p148, %p149
    %p152 = scmp.ne.s32.totalorder %s135, %s151
    %p153 = scmp.eq.s32.totalorder %s17, 0
    %p154 = por %p152, %p153
    %p155 = scmp.le.s32.totalorder 1, %s11
    %p156 = scmp.lt.s32.totalorder %s11, 3
    %p157 = pnand %p155, %p156
    %p158 = pneg %p157
    // Predicated region
    $region9: #{tpu_custom_call.1} parent=5 // pred_check
      _
    $region10: #{tpu_custom_call.1} parent=5 // pred_check_branch
      %160 = sbr.rel (%p157) target = $region12
    $region11: #{tpu_custom_call.1} parent=5 // pred_region
      %s161 = ssub.s32 %s11, 1
      // Predicated region
      $region13: #{tpu_custom_call.1} parent=11 // pred_check
        %p162 = pneg %p58
      $region14: #{tpu_custom_call.1} parent=11 // pred_check_branch
        %164 = sbr.rel (%p162) target = $region16
      $region15: #{tpu_custom_call.1} parent=11 // pred_region
        _
      $region16: #{tpu_custom_call.1} parent=11 // pred_fallthru
        _
      // Predicated region
      $region17: #{tpu_custom_call.1} parent=11 // pred_check
        %p165 = pneg %p79
      $region18: #{tpu_custom_call.1} parent=11 // pred_check_branch
        %167 = sbr.rel (%p165) target = $region20
      $region19: #{tpu_custom_call.1} parent=11 // pred_region
        _
      $region20: #{tpu_custom_call.1} parent=11 // pred_fallthru
        _
      // Predicated region
      $region21: #{tpu_custom_call.1} parent=11 // pred_check
        %p168 = pneg %p100
      $region22: #{tpu_custom_call.1} parent=11 // pred_check_branch
        %170 = sbr.rel (%p168) target = $region24
      $region23: #{tpu_custom_call.1} parent=11 // pred_region
        _
      $region24: #{tpu_custom_call.1} parent=11 // pred_fallthru
        _
      // Predicated region
      $region25: #{tpu_custom_call.1} parent=11 // pred_check
        %p171 = pneg %p121
      $region26: #{tpu_custom_call.1} parent=11 // pred_check_branch
        %173 = sbr.rel (%p171) target = $region28
      $region27: #{tpu_custom_call.1} parent=11 // pred_region
        _
      $region28: #{tpu_custom_call.1} parent=11 // pred_fallthru
        _
    $region12: #{tpu_custom_call.1} parent=5 // pred_fallthru
      _
    %p174 = scmp.lt.s32.totalorder %s11, 2
    // Predicated region
    $region29: #{tpu_custom_call.1} parent=5 // pred_check
      %p175 = pneg %p174
    $region30: #{tpu_custom_call.1} parent=5 // pred_check_branch
      %177 = sbr.rel (%p175) target = $region32
    $region31: #{tpu_custom_call.1} parent=5 // pred_region
      // Predicated region
      $region33: #{tpu_custom_call.1} parent=31 // pred_check
        %p178 = pneg %p31
      $region34: #{tpu_custom_call.1} parent=31 // pred_check_branch
        %180 = sbr.rel (%p178) target = $region36
      $region35: #{tpu_custom_call.1} parent=31 // pred_region
        %s181 = smul.u32 8, %s11
        %p182 = scmp.lt.s32.totalorder %s181, 15
        %s183 = scalar_select %p182, %s181, 15
        %s184 = smul.addr %s183, 8
        %s185 = scalar_lea.vmem %s0, %s184
        %s186 = smul.u32 8, %s11
      $region36: #{tpu_custom_call.1} parent=31 // pred_fallthru
        _
    $region32: #{tpu_custom_call.1} parent=5 // pred_fallthru
      _
    %p187 = scmp.le.s32.totalorder 1, %s11
    %p188 = scmp.lt.s32.totalorder %s11, 3
    %p189 = pnand %p187, %p188
    %p190 = pneg %p189
    // Predicated region
    $region37: #{tpu_custom_call.1} parent=5 // pred_check
      _
    $region38: #{tpu_custom_call.1} parent=5 // pred_check_branch
      %192 = sbr.rel (%p189) target = $region40
    $region39: #{tpu_custom_call.1} parent=5 // pred_region
      %s193 = ssub.s32 %s11, 1
      %s194 = smul.u32 8, %s16
      %p195 = scmp.lt.s32.totalorder %s194, 15
      %s196 = scalar_select %p195, %s194, 15
      %s197 = smul.addr %s196, 8
      %s198 = scalar_lea.vmem %s0, %s197
      %p199 = pneg %p37
      %p200 = pneg %p34
      %p201 = pneg %p58
      %p202 = pneg %p55
      %p203 = pneg %p79
      %p204 = pneg %p76
      %p205 = pneg %p100
      %p206 = pneg %p97
      %p207 = pneg %p121
      %p208 = pneg %p118
      %p209 = pneg %p147
      %p210 = pneg %p144
      %s211 = smul.u32 8, %s16
      %p212 = scmp.lt.s32.totalorder %s211, 15
      %s213 = scalar_select %p212, %s211, 15
      %s214 = smul.addr %s213, 8
      %s215 = scalar_lea.vmem %s5, %s214
      %s216 = smul.u32 8, %s16
      %p217 = scmp.lt.s32.totalorder %s216, 15
      %s218 = scalar_select %p217, %s216, 15
      %s219 = smul.addr %s218, 8
      %s220 = scalar_lea.vmem %s0, %s219
      %s221 = smul.u32 8, %s16
      %s222 = smul.u32 8, %s16
      %p223 = scmp.lt.s32.totalorder %s222, 15
      %s224 = scalar_select %p223, %s222, 15
      %s225 = smul.addr %s224, 8
      %s226 = scalar_lea.vmem %s5, %s225
      %s227 = smul.u32 8, %s16
      %v228 = vld [vmem:[%s220] sm:$0xff]
      %v229 = vld [vmem:[%s220 + $0x8] sm:$0xff]
      %v230 = vld [vmem:[%s220 + $0x10] sm:$0xff]
      %v231 = vld [vmem:[%s220 + $0x18] sm:$0xff]
      %v232 = vld [vmem:[%s220 + $0x20] sm:$0xff]
      %v233 = vld [vmem:[%s220 + $0x28] sm:$0xff]
      %v234 = vld [vmem:[%s220 + $0x30] sm:$0xff]
      %v235 = vld [vmem:[%s220 + $0x38] sm:$0xff]
      %v236 = vld [vmem:[%s1] sm:$0xff]
      %v237 = vld [vmem:[%s1 + $0x8] sm:$0xff]
      %v238 = vld [vmem:[%s1 + $0x10] sm:$0xff]
      %v239 = vld [vmem:[%s1 + $0x18] sm:$0xff]
      %v240 = vld [vmem:[%s2] sm:$0x1]
      %v242 = vperm.slane %v240, 0
      %vm244 = vcmask 261120
      %v246 = vsel %vm244, %v228, 0
      %v249 = vsel %vm244, %v229, 0
      %v252 = vsel %vm244, %v230, 0
      %v255 = vsel %vm244, %v231, 0
      %v258 = vsel %vm244, %v232, 0
      %v261 = vsel %vm244, %v233, 0
      %v264 = vsel %vm244, %v234, 0
      %v267 = vsel %vm244, %v235, 0
      %269 = vmatpush.msra.mxu0 0.0
      %270 = vmatpush.msra.mxu0 0.0
      %271 = vmatpush.msra.mxu0 0.0
      %272 = vmatpush.msra.mxu0 0.0
      %273 = vmatpush.msra.mxu0 0.0
      %274 = vmatpush.msra.mxu0 0.0
      %275 = vmatpush.msra.mxu0 0.0
      %276 = vmatpush.msra.mxu0 0.0
      %277 = vmatpush.msra.mxu0 0.0
      %278 = vmatpush.msra.mxu0 0.0
      %279 = vmatpush.msra.mxu0 0.0
      %280 = vmatpush.msra.mxu0 0.0
      %281 = vmatpush.msra.mxu0 %v239
      %282 = vmatpush.msra.mxu0 %v238
      %283 = vmatpush.msra.mxu0 %v237
      %284 = vmatpush.msra.mxu0 %v236
      %285 = vmatmul.f32.gmra.mxu0 %v246
      %v286 = vpop.f32.mrf.mxu0
      %v287 = vadd.f32 %v242, %v286
      %288 = vmatmul.f32.gmra.mxu0 %v249
      %v289 = vpop.f32.mrf.mxu0
      %v290 = vadd.f32 %v242, %v289
      %291 = vmatmul.f32.gmra.mxu0 %v252
      %v292 = vpop.f32.mrf.mxu0
      %v293 = vadd.f32 %v242, %v292
      %294 = vmatmul.f32.gmra.mxu0 %v255
      %v295 = vpop.f32.mrf.mxu0
      %v296 = vadd.f32 %v242, %v295
      %297 = vmatmul.f32.gmra.mxu0 %v258
      %v298 = vpop.f32.mrf.mxu0
      %v299 = vadd.f32 %v242, %v298
      %300 = vmatmul.f32.gmra.mxu0 %v261
      %v301 = vpop.f32.mrf.mxu0
      %v302 = vadd.f32 %v242, %v301
      %303 = vmatmul.f32.gmra.mxu0 %v264
      %v304 = vpop.f32.mrf.mxu0
      %v305 = vadd.f32 %v242, %v304
      %306 = vmatmul.f32.gmra.mxu0 %v267
      %v307 = vpop.f32.mrf.mxu0
      %v308 = vadd.f32 %v242, %v307
      %309 = vdwg.mxu0
      %v310 = vmul.f32 %v287, 0.70710677
      %v311 = vmul.f32 %v290, 0.70710677
      %v312 = vmul.f32 %v293, 0.70710677
      %v313 = vmul.f32 %v296, 0.70710677
      %v314 = vmul.f32 %v299, 0.70710677
      %v315 = vmul.f32 %v302, 0.70710677
      %v316 = vmul.f32 %v305, 0.70710677
      %v317 = vmul.f32 %v308, 0.70710677
      %v318 = vand.u32 2147483647, %v310
      %v319 = vand.u32 2147483647, %v311
      %v320 = vand.u32 2147483647, %v312
      %v321 = vand.u32 2147483647, %v313
      %v322 = vand.u32 2147483647, %v314
      %v323 = vand.u32 2147483647, %v315
      %v324 = vand.u32 2147483647, %v316
      %v325 = vand.u32 2147483647, %v317
      %v326 = vmul.f32 %v318, 0.3275911
      %v327 = vmul.f32 %v319, 0.3275911
      %v328 = vmul.f32 %v320, 0.3275911
      %v329 = vmul.f32 %v321, 0.3275911
      %v330 = vmul.f32 %v322, 0.3275911
      %v331 = vmul.f32 %v323, 0.3275911
      %v332 = vmul.f32 %v324, 0.3275911
      %v333 = vmul.f32 %v325, 0.3275911
      %v334 = vadd.f32 %v326, 1.0
      %v335 = vadd.f32 %v327, 1.0
      %v336 = vadd.f32 %v328, 1.0
      %v337 = vadd.f32 %v329, 1.0
      %v338 = vadd.f32 %v330, 1.0
      %v339 = vadd.f32 %v331, 1.0
      %v340 = vadd.f32 %v332, 1.0
      %v341 = vadd.f32 %v333, 1.0
      %v342 = vrcp.pop %v334
      %v343 = vmul.f32 %v334, %v342
      %v344 = vsub.f32 1.0, %v343
      %v345 = vmul.f32 %v342, %v344
      %v346 = vadd.f32 %v342, %v345
      %vm347 = vweird.f32 %v334
      %vm348 = vweird.f32 %v342
      %vm349 = vmor %vm347, %vm348
      %v350 = vsel %vm349, %v342, %v346
      %v351 = vand.u32 2147483647, %v334
      %vm352 = vcmp.eq.f32.partialorder %v351, 8.507059e+37
      %v353 = vand.u32 %v334, 2147483648
      %v354 = vor.u32 1.1754944e-38, %v353
      %v355 = vsel %vm352, %v354, %v350
      %v356 = vmul.f32 1.0, %v355
      %v357 = vrcp.pop %v335
      %v358 = vmul.f32 %v335, %v357
      %v359 = vsub.f32 1.0, %v358
      %v360 = vmul.f32 %v357, %v359
      %v361 = vadd.f32 %v357, %v360
      %vm362 = vweird.f32 %v335
      %vm363 = vweird.f32 %v357
      %vm364 = vmor %vm362, %vm363
      %v365 = vsel %vm364, %v357, %v361
      %v366 = vand.u32 2147483647, %v335
      %vm367 = vcmp.eq.f32.partialorder %v366, 8.507059e+37
      %v368 = vand.u32 %v335, 2147483648
      %v369 = vor.u32 1.1754944e-38, %v368
      %v370 = vsel %vm367, %v369, %v365
      %v371 = vmul.f32 1.0, %v370
      %v372 = vrcp.pop %v336
      %v373 = vmul.f32 %v336, %v372
      %v374 = vsub.f32 1.0, %v373
      %v375 = vmul.f32 %v372, %v374
      %v376 = vadd.f32 %v372, %v375
      %vm377 = vweird.f32 %v336
      %vm378 = vweird.f32 %v372
      %vm379 = vmor %vm377, %vm378
      %v380 = vsel %vm379, %v372, %v376
      %v381 = vand.u32 2147483647, %v336
      %vm382 = vcmp.eq.f32.partialorder %v381, 8.507059e+37
      %v383 = vand.u32 %v336, 2147483648
      %v384 = vor.u32 1.1754944e-38, %v383
      %v385 = vsel %vm382, %v384, %v380
      %v386 = vmul.f32 1.0, %v385
      %v387 = vrcp.pop %v337
      %v388 = vmul.f32 %v337, %v387
      %v389 = vsub.f32 1.0, %v388
      %v390 = vmul.f32 %v387, %v389
      %v391 = vadd.f32 %v387, %v390
      %vm392 = vweird.f32 %v337
      %vm393 = vweird.f32 %v387
      %vm394 = vmor %vm392, %vm393
      %v395 = vsel %vm394, %v387, %v391
      %v396 = vand.u32 2147483647, %v337
      %vm397 = vcmp.eq.f32.partialorder %v396, 8.507059e+37
      %v398 = vand.u32 %v337, 2147483648
      %v399 = vor.u32 1.1754944e-38, %v398
      %v400 = vsel %vm397, %v399, %v395
      %v401 = vmul.f32 1.0, %v400
      %v402 = vrcp.pop %v338
      %v403 = vmul.f32 %v338, %v402
      %v404 = vsub.f32 1.0, %v403
      %v405 = vmul.f32 %v402, %v404
      %v406 = vadd.f32 %v402, %v405
      %vm407 = vweird.f32 %v338
      %vm408 = vweird.f32 %v402
      %vm409 = vmor %vm407, %vm408
      %v410 = vsel %vm409, %v402, %v406
      %v411 = vand.u32 2147483647, %v338
      %vm412 = vcmp.eq.f32.partialorder %v411, 8.507059e+37
      %v413 = vand.u32 %v338, 2147483648
      %v414 = vor.u32 1.1754944e-38, %v413
      %v415 = vsel %vm412, %v414, %v410
      %v416 = vmul.f32 1.0, %v415
      %v417 = vrcp.pop %v339
      %v418 = vmul.f32 %v339, %v417
      %v419 = vsub.f32 1.0, %v418
      %v420 = vmul.f32 %v417, %v419
      %v421 = vadd.f32 %v417, %v420
      %vm422 = vweird.f32 %v339
      %vm423 = vweird.f32 %v417
      %vm424 = vmor %vm422, %vm423
      %v425 = vsel %vm424, %v417, %v421
      %v426 = vand.u32 2147483647, %v339
      %vm427 = vcmp.eq.f32.partialorder %v426, 8.507059e+37
      %v428 = vand.u32 %v339, 2147483648
      %v429 = vor.u32 1.1754944e-38, %v428
      %v430 = vsel %vm427, %v429, %v425
      %v431 = vmul.f32 1.0, %v430
      %v432 = vrcp.pop %v340
      %v433 = vmul.f32 %v340, %v432
      %v434 = vsub.f32 1.0, %v433
      %v435 = vmul.f32 %v432, %v434
      %v436 = vadd.f32 %v432, %v435
      %vm437 = vweird.f32 %v340
      %vm438 = vweird.f32 %v432
      %vm439 = vmor %vm437, %vm438
      %v440 = vsel %vm439, %v432, %v436
      %v441 = vand.u32 2147483647, %v340
      %vm442 = vcmp.eq.f32.partialorder %v441, 8.507059e+37
      %v443 = vand.u32 %v340, 2147483648
      %v444 = vor.u32 1.1754944e-38, %v443
      %v445 = vsel %vm442, %v444, %v440
      %v446 = vmul.f32 1.0, %v445
      %v447 = vrcp.pop %v341
      %v448 = vmul.f32 %v341, %v447
      %v449 = vsub.f32 1.0, %v448
      %v450 = vmul.f32 %v447, %v449
      %v451 = vadd.f32 %v447, %v450
      %vm452 = vweird.f32 %v341
      %vm453 = vweird.f32 %v447
      %vm454 = vmor %vm452, %vm453
      %v455 = vsel %vm454, %v447, %v451
      %v456 = vand.u32 2147483647, %v341
      %vm457 = vcmp.eq.f32.partialorder %v456, 8.507059e+37
      %v458 = vand.u32 %v341, 2147483648
      %v459 = vor.u32 1.1754944e-38, %v458
      %v460 = vsel %vm457, %v459, %v455
      %v461 = vmul.f32 1.0, %v460
      %v462 = vmul.f32 %v356, 1.0614054
      %v463 = vmul.f32 %v371, 1.0614054
      %v464 = vmul.f32 %v386, 1.0614054
      %v465 = vmul.f32 %v401, 1.0614054
      %v466 = vmul.f32 %v416, 1.0614054
      %v467 = vmul.f32 %v431, 1.0614054
      %v468 = vmul.f32 %v446, 1.0614054
      %v469 = vmul.f32 %v461, 1.0614054
      %v470 = vadd.f32 %v462, -1.4531521
      %v471 = vadd.f32 %v463, -1.4531521
      %v472 = vadd.f32 %v464, -1.4531521
      %v473 = vadd.f32 %v465, -1.4531521
      %v474 = vadd.f32 %v466, -1.4531521
      %v475 = vadd.f32 %v467, -1.4531521
      %v476 = vadd.f32 %v468, -1.4531521
      %v477 = vadd.f32 %v469, -1.4531521
      %v478 = vmul.f32 %v356, %v470
      %v479 = vmul.f32 %v371, %v471
      %v480 = vmul.f32 %v386, %v472
      %v481 = vmul.f32 %v401, %v473
      %v482 = vmul.f32 %v416, %v474
      %v483 = vmul.f32 %v431, %v475
      %v484 = vmul.f32 %v446, %v476
      %v485 = vmul.f32 %v461, %v477
      %v486 = vadd.f32 %v478, 1.4214138
      %v487 = vadd.f32 %v479, 1.4214138
      %v488 = vadd.f32 %v480, 1.4214138
      %v489 = vadd.f32 %v481, 1.4214138
      %v490 = vadd.f32 %v482, 1.4214138
      %v491 = vadd.f32 %v483, 1.4214138
      %v492 = vadd.f32 %v484, 1.4214138
      %v493 = vadd.f32 %v485, 1.4214138
      %v494 = vmul.f32 %v356, %v486
      %v495 = vmul.f32 %v371, %v487
      %v496 = vmul.f32 %v386, %v488
      %v497 = vmul.f32 %v401, %v489
      %v498 = vmul.f32 %v416, %v490
      %v499 = vmul.f32 %v431, %v491
      %v500 = vmul.f32 %v446, %v492
      %v501 = vmul.f32 %v461, %v493
      %v502 = vadd.f32 %v494, -0.28449672
      %v503 = vadd.f32 %v495, -0.28449672
      %v504 = vadd.f32 %v496, -0.28449672
      %v505 = vadd.f32 %v497, -0.28449672
      %v506 = vadd.f32 %v498, -0.28449672
      %v507 = vadd.f32 %v499, -0.28449672
      %v508 = vadd.f32 %v500, -0.28449672
      %v509 = vadd.f32 %v501, -0.28449672
      %v510 = vmul.f32 %v356, %v502
      %v511 = vmul.f32 %v371, %v503
      %v512 = vmul.f32 %v386, %v504
      %v513 = vmul.f32 %v401, %v505
      %v514 = vmul.f32 %v416, %v506
      %v515 = vmul.f32 %v431, %v507
      %v516 = vmul.f32 %v446, %v508
      %v517 = vmul.f32 %v461, %v509
      %v518 = vadd.f32 %v510, 0.2548296
      %v519 = vadd.f32 %v511, 0.2548296
      %v520 = vadd.f32 %v512, 0.2548296
      %v521 = vadd.f32 %v513, 0.2548296
      %v522 = vadd.f32 %v514, 0.2548296
      %v523 = vadd.f32 %v515, 0.2548296
      %v524 = vadd.f32 %v516, 0.2548296
      %v525 = vadd.f32 %v517, 0.2548296
      %v526 = vmul.f32 %v356, %v518
      %v527 = vmul.f32 %v371, %v519
      %v528 = vmul.f32 %v386, %v520
      %v529 = vmul.f32 %v401, %v521
      %v530 = vmul.f32 %v416, %v522
      %v531 = vmul.f32 %v431, %v523
      %v532 = vmul.f32 %v446, %v524
      %v533 = vmul.f32 %v461, %v525
      %v534 = vsub.f32 0.0, %v318
      %v535 = vsub.f32 0.0, %v319
      %v536 = vsub.f32 0.0, %v320
      %v537 = vsub.f32 0.0, %v321
      %v538 = vsub.f32 0.0, %v322
      %v539 = vsub.f32 0.0, %v323
      %v540 = vsub.f32 0.0, %v324
      %v541 = vsub.f32 0.0, %v325
      %v542 = vmul.f32 %v534, %v318
      %v543 = vmul.f32 %v535, %v319
      %v544 = vmul.f32 %v536, %v320
      %v545 = vmul.f32 %v537, %v321
      %v546 = vmul.f32 %v538, %v322
      %v547 = vmul.f32 %v539, %v323
      %v548 = vmul.f32 %v540, %v324
      %v549 = vmul.f32 %v541, %v325
      %v550 = vmul.f32 %v542, 1.442695
      %v551 = vpow.pop %v550
      %v552 = vmul.f32 %v543, 1.442695
      %v553 = vpow.pop %v552
      %v554 = vmul.f32 %v544, 1.442695
      %v555 = vpow.pop %v554
      %v556 = vmul.f32 %v545, 1.442695
      %v557 = vpow.pop %v556
      %v558 = vmul.f32 %v546, 1.442695
      %v559 = vpow.pop %v558
      %v560 = vmul.f32 %v547, 1.442695
      %v561 = vpow.pop %v560
      %v562 = vmul.f32 %v548, 1.442695
      %v563 = vpow.pop %v562
      %v564 = vmul.f32 %v549, 1.442695
      %v565 = vpow.pop %v564
      %v566 = vmul.f32 %v526, %v551
      %v567 = vmul.f32 %v527, %v553
      %v568 = vmul.f32 %v528, %v555
      %v569 = vmul.f32 %v529, %v557
      %v570 = vmul.f32 %v530, %v559
      %v571 = vmul.f32 %v531, %v561
      %v572 = vmul.f32 %v532, %v563
      %v573 = vmul.f32 %v533, %v565
      %v574 = vsub.f32 1.0, %v566
      %v575 = vsub.f32 1.0, %v567
      %v576 = vsub.f32 1.0, %v568
      %v577 = vsub.f32 1.0, %v569
      %v578 = vsub.f32 1.0, %v570
      %v579 = vsub.f32 1.0, %v571
      %v580 = vsub.f32 1.0, %v572
      %v581 = vsub.f32 1.0, %v573
      %vm582 = vcmp.ge.f32.partialorder %v310, 0.0
      %vm583 = vcmp.ge.f32.partialorder %v311, 0.0
      %vm584 = vcmp.ge.f32.partialorder %v312, 0.0
      %vm585 = vcmp.ge.f32.partialorder %v313, 0.0
      %vm586 = vcmp.ge.f32.partialorder %v314, 0.0
      %vm587 = vcmp.ge.f32.partialorder %v315, 0.0
      %vm588 = vcmp.ge.f32.partialorder %v316, 0.0
      %vm589 = vcmp.ge.f32.partialorder %v317, 0.0
      %v590 = vsub.f32 0.0, %v574
      %v591 = vsub.f32 0.0, %v575
      %v592 = vsub.f32 0.0, %v576
      %v593 = vsub.f32 0.0, %v577
      %v594 = vsub.f32 0.0, %v578
      %v595 = vsub.f32 0.0, %v579
      %v596 = vsub.f32 0.0, %v580
      %v597 = vsub.f32 0.0, %v581
      %v598 = vsel %vm582, %v574, %v590
      %v599 = vsel %vm583, %v575, %v591
      %v600 = vsel %vm584, %v576, %v592
      %v601 = vsel %vm585, %v577, %v593
      %v602 = vsel %vm586, %v578, %v594
      %v603 = vsel %vm587, %v579, %v595
      %v604 = vsel %vm588, %v580, %v596
      %v605 = vsel %vm589, %v581, %v597
      %v606 = vmul.f32 %v287, 0.5
      %v607 = vmul.f32 %v290, 0.5
      %v608 = vmul.f32 %v293, 0.5
      %v609 = vmul.f32 %v296, 0.5
      %v610 = vmul.f32 %v299, 0.5
      %v611 = vmul.f32 %v302, 0.5
      %v612 = vmul.f32 %v305, 0.5
      %v613 = vmul.f32 %v308, 0.5
      %v614 = vadd.f32 %v598, 1.0
      %v615 = vadd.f32 %v599, 1.0
      %v616 = vadd.f32 %v600, 1.0
      %v617 = vadd.f32 %v601, 1.0
      %v618 = vadd.f32 %v602, 1.0
      %v619 = vadd.f32 %v603, 1.0
      %v620 = vadd.f32 %v604, 1.0
      %v621 = vadd.f32 %v605, 1.0
      %v622 = vmul.f32 %v606, %v614
      %v623 = vmul.f32 %v607, %v615
      %v624 = vmul.f32 %v608, %v616
      %v625 = vmul.f32 %v609, %v617
      %v626 = vmul.f32 %v610, %v618
      %v627 = vmul.f32 %v611, %v619
      %v628 = vmul.f32 %v612, %v620
      %v629 = vmul.f32 %v613, %v621
      %v630 = vld [vmem:[%s3] sm:$0xff]
      %v631 = vld [vmem:[%s3 + $0x8] sm:$0xff]
      %v632 = vld [vmem:[%s3 + $0x10] sm:$0xff]
      %v633 = vld [vmem:[%s3 + $0x18] sm:$0xff]
      %v634 = vld [vmem:[%s3 + $0x20] sm:$0xff]
      %v635 = vld [vmem:[%s3 + $0x28] sm:$0xff]
      %v636 = vld [vmem:[%s3 + $0x30] sm:$0xff]
      %v637 = vld [vmem:[%s3 + $0x38] sm:$0xff]
      %v638 = vld [vmem:[%s4] sm:$0x1]
      %v640 = vperm.slane %v638, 0
      %vm642 = vcmask 523264
      %v644 = vsel %vm642, %v622, 0
      %v647 = vsel %vm642, %v623, 0
      %v650 = vsel %vm642, %v624, 0
      %v653 = vsel %vm642, %v625, 0
      %v656 = vsel %vm642, %v626, 0
      %v659 = vsel %vm642, %v627, 0
      %v662 = vsel %vm642, %v628, 0
      %v665 = vsel %vm642, %v629, 0
      %667 = vmatpush.msra.mxu0 0.0
      %668 = vmatpush.msra.mxu0 0.0
      %669 = vmatpush.msra.mxu0 0.0
      %670 = vmatpush.msra.mxu0 0.0
      %671 = vmatpush.msra.mxu0 0.0
      %672 = vmatpush.msra.mxu0 0.0
      %673 = vmatpush.msra.mxu0 0.0
      %674 = vmatpush.msra.mxu0 0.0
      %675 = vmatpush.msra.mxu0 %v637
      %676 = vmatpush.msra.mxu0 %v636
      %677 = vmatpush.msra.mxu0 %v635
      %678 = vmatpush.msra.mxu0 %v634
      %679 = vmatpush.msra.mxu0 %v633
      %680 = vmatpush.msra.mxu0 %v632
      %681 = vmatpush.msra.mxu0 %v631
      %682 = vmatpush.msra.mxu0 %v630
      %683 = vmatmul.f32.gmra.mxu0 %v644
      %v684 = vpop.f32.mrf.mxu0
      %v685 = vadd.f32 %v640, %v684
      %686 = vmatmul.f32.gmra.mxu0 %v647
      %v687 = vpop.f32.mrf.mxu0
      %v688 = vadd.f32 %v640, %v687
      %689 = vmatmul.f32.gmra.mxu0 %v650
      %v690 = vpop.f32.mrf.mxu0
      %v691 = vadd.f32 %v640, %v690
      %692 = vmatmul.f32.gmra.mxu0 %v653
      %v693 = vpop.f32.mrf.mxu0
      %v694 = vadd.f32 %v640, %v693
      %695 = vmatmul.f32.gmra.mxu0 %v656
      %v696 = vpop.f32.mrf.mxu0
      %v697 = vadd.f32 %v640, %v696
      %698 = vmatmul.f32.gmra.mxu0 %v659
      %v699 = vpop.f32.mrf.mxu0
      %v700 = vadd.f32 %v640, %v699
      %701 = vmatmul.f32.gmra.mxu0 %v662
      %v702 = vpop.f32.mrf.mxu0
      %v703 = vadd.f32 %v640, %v702
      %704 = vmatmul.f32.gmra.mxu0 %v665
      %v705 = vpop.f32.mrf.mxu0
      %v706 = vadd.f32 %v640, %v705
      %707 = vdwg.mxu0
      %708 = vst.msk [vmem:[%s226] sm:$0xff] %vm642, %v685
      %709 = vst.msk [vmem:[%s226 + $0x8] sm:$0xff] %vm642, %v688
      %710 = vst.msk [vmem:[%s226 + $0x10] sm:$0xff] %vm642, %v691
      %711 = vst.msk [vmem:[%s226 + $0x18] sm:$0xff] %vm642, %v694
      %712 = vst.msk [vmem:[%s226 + $0x20] sm:$0xff] %vm642, %v697
      %713 = vst.msk [vmem:[%s226 + $0x28] sm:$0xff] %vm642, %v700
      %714 = vst.msk [vmem:[%s226 + $0x30] sm:$0xff] %vm642, %v703
      %715 = vst.msk [vmem:[%s226 + $0x38] sm:$0xff] %vm642, %v706
      %s716 = smul.u32 8, %s16
      %p717 = scmp.lt.s32.totalorder %s716, 15
      %s718 = scalar_select %p717, %s716, 15
      %s719 = smul.addr %s718, 8
      %s720 = scalar_lea.vmem %s5, %s719
      // Predicated region
      $region41: #{tpu_custom_call.1} parent=39 // pred_check
        %p721 = pneg %p144
      $region42: #{tpu_custom_call.1} parent=39 // pred_check_branch
        %723 = sbr.rel (%p721) target = $region44
      $region43: #{tpu_custom_call.1} parent=39 // pred_region
        %s724 = smul.u32 8, %s16
      $region44: #{tpu_custom_call.1} parent=39 // pred_fallthru
        _
    $region40: #{tpu_custom_call.1} parent=5 // pred_fallthru
      _
    %p725 = scmp.le.s32.totalorder 2, %s11
    // Predicated region
    $region45: #{tpu_custom_call.1} parent=5 // pred_check
      %p726 = pneg %p725
    $region46: #{tpu_custom_call.1} parent=5 // pred_check_branch
      %728 = sbr.rel (%p726) target = $region48
    $region47: #{tpu_custom_call.1} parent=5 // pred_region
      %s729 = ssub.s32 %s11, 2
      // Predicated region
      $region49: #{tpu_custom_call.1} parent=47 // pred_check
        %p730 = pneg %p150
      $region50: #{tpu_custom_call.1} parent=47 // pred_check_branch
        %732 = sbr.rel (%p730) target = $region52
      $region51: #{tpu_custom_call.1} parent=47 // pred_region
        %s733 = smul.u32 8, %s17
        %p734 = scmp.lt.s32.totalorder %s733, 15
        %s735 = scalar_select %p734, %s733, 15
        %s736 = smul.addr %s735, 8
        %s737 = scalar_lea.vmem %s5, %s736
      $region52: #{tpu_custom_call.1} parent=47 // pred_fallthru
        _
    $region48: #{tpu_custom_call.1} parent=5 // pred_fallthru
      _
  $region6: #{tpu_custom_call.1} parent=0 // loop_footer
    %s15 = sadd.s32 1, %s11
  $region7: #{tpu_custom_call.1} parent=0 // loop_footer_branch
    %10 = sbr.rel target = $region3
  $region8: #{tpu_custom_call.1} parent=0 // loop_exit
    _

</llo_original>
